<compile_context>
chip_gen: v7x
topology: tpu7x:2x2x1
jax: 0.10.0
libtpu: 0.0.40
codegen_flags: <defaults>
</compile_context>

<pallas_src>
import functools

import jax
import jax.numpy as jnp
from jax.experimental import pallas as pl
from jax.experimental.pallas import tpu as pltpu

_LANE = 128          # lane width: feature axis padded to a multiple of this
_SUBLANE = 16        # bf16 sublane tile: batch axis padded to a multiple of this
_VMEM_LIMIT = 32 * 1024 * 1024   # fits v5e/v6e/v7x physical VMEM


def _round_up(x, m):
    return (x + m - 1) // m * m


# ---------------------------------------------------------------------------
# Kernel 1: input projection (off the serial path)
#   u = x @ w1 + b  for all timesteps at once, tiled over rows of x (T*B, In).
# ---------------------------------------------------------------------------
def _input_proj_kernel(x_ref, w1_ref, b_ref, u_ref):
    acc = jnp.dot(x_ref[...], w1_ref[...], preferred_element_type=jnp.float32)
    u_ref[...] = (acc + b_ref[...]).astype(u_ref.dtype)


def _input_projection(x2d, w1p, b2d, tm):
    M, K = x2d.shape
    N = w1p.shape[1]
    return pl.pallas_call(
        _input_proj_kernel,
        out_shape=jax.ShapeDtypeStruct((M, N), w1p.dtype),
        grid=(pl.cdiv(M, tm),),
        in_specs=[
            pl.BlockSpec((tm, K), lambda i: (i, 0)),   # streamed row tile of x
            pl.BlockSpec((K, N), lambda i: (0, 0)),    # w1: resident
            pl.BlockSpec((1, N), lambda i: (0, 0)),    # bias: resident
        ],
        out_specs=pl.BlockSpec((tm, N), lambda i: (i, 0)),
        compiler_params=pltpu.CompilerParams(
            dimension_semantics=("parallel",),
            vmem_limit_bytes=_VMEM_LIMIT,
        ),
    )(x2d, w1p, b2d)


# ---------------------------------------------------------------------------
# Kernel 2: fused recurrence, TT timesteps per grid iteration.
#   grid = (batch_blocks, T/TT); batch axis "parallel" (v7x megacore),
#   time axis "arbitrary" (serial carry in a VMEM scratch).
# ---------------------------------------------------------------------------
def _recurrence_kernel(u_ref, prev0_ref, w2_ref, out_ref, prev_scr):
    # u_ref/out_ref blocks: (TT, bb, Np). prev0/w2 resident across the t axis.
    @pl.when(pl.program_id(1) == 0)
    def _():
        prev_scr[...] = prev0_ref[...]

    mxu_dtype = w2_ref.dtype

    def step(i, carry):
        d = jnp.dot(prev_scr[...].astype(mxu_dtype), w2_ref[...],
                    preferred_element_type=jnp.float32)
        h = jnp.tanh(u_ref[i].astype(jnp.float32) + d)   # f32 epilogue
        prev_scr[...] = h
        out_ref[i] = h
        return carry

    jax.lax.fori_loop(0, u_ref.shape[0], step, 0, unroll=True)


def _recurrence(u, prev0, w2p, tt, bb):
    Tp, Bp, N = u.shape
    return pl.pallas_call(
        _recurrence_kernel,
        out_shape=jax.ShapeDtypeStruct((Tp, Bp, N), jnp.float32),
        grid=(Bp // bb, Tp // tt),
        in_specs=[
            pl.BlockSpec((tt, bb, N), lambda b, t: (t, b, 0)),  # u: pipelined
            pl.BlockSpec((bb, N), lambda b, t: (b, 0)),         # prev0: resident
            pl.BlockSpec((N, N), lambda b, t: (0, 0)),          # w2: resident
        ],
        out_specs=pl.BlockSpec((tt, bb, N), lambda b, t: (t, b, 0)),
        scratch_shapes=[pltpu.VMEM((bb, N), jnp.float32)],       # carried state
        compiler_params=pltpu.CompilerParams(
            dimension_semantics=("parallel", "arbitrary"),
            vmem_limit_bytes=_VMEM_LIMIT,
        ),
    )(u, prev0, w2p)


# ---------------------------------------------------------------------------
# Jitted sequence forward on pre-padded weights.
# ---------------------------------------------------------------------------
@functools.partial(jax.jit, static_argnames=("out_features",))
def elman_sequence_padded(xs, prevp, w1p, w2p, bp, *, out_features):
    """xs: (T, B, In) f32.  prevp: (Bp, Np) f32 padded state.
    w1p/w2p: zero-padded, compute-dtype weights.  bp: (1, Np) f32.
    Returns (outs (T, B, out_features) f32, new padded state (Bp, Np) f32)."""
    T, B, In = xs.shape
    Bp, Np = prevp.shape

    tt = min(T, 16)                       # timesteps per grid iteration
    Tp = _round_up(T, tt)
    bb = Bp // 2 if (Bp >= 32 and Bp % 32 == 0) else Bp   # v7x: split batch
    Mp = Tp * Bp
    tm = min(512, Mp)                     # row tile for the input projection

    # Zero-pad time & batch. Padded feature columns of w1/w2/b are zero, so
    # padded lanes stay exactly 0 through tanh -> the final slice is exact.
    xs_p = jnp.pad(xs, ((0, Tp - T), (0, Bp - B), (0, 0)))
    x2d = xs_p.reshape(Mp, In).astype(w1p.dtype)

    u = _input_projection(x2d, w1p, bp, tm).reshape(Tp, Bp, Np)
    outs_p = _recurrence(u, prevp, w2p, tt, bb)

    new_prevp = outs_p[T - 1]
    return outs_p[:T, :B, :out_features], new_prevp


# ---------------------------------------------------------------------------
# Stateful wrapper mirroring the PyTorch module.
# ---------------------------------------------------------------------------
class ElmanLayer:
    def __init__(self, in_features, out_features, key, compute_dtype=jnp.bfloat16):
        self.in_features = in_features
        self.out_features = out_features
        self.compute_dtype = compute_dtype
        k1, k2, k3 = jax.random.split(key, 3)
        self.w1 = jax.random.normal(k1, (in_features, out_features), jnp.float32)
        self.w2 = jax.random.normal(k2, (out_features, out_features), jnp.float32)
        self.b = jax.random.normal(k3, (out_features,), jnp.float32)

        # Padding / casting of weights hoisted off the per-call path.
        Np = _round_up(out_features, _LANE)
        pad = Np - out_features
        self._Np = Np
        self._w1p = jnp.pad(self.w1, ((0, 0), (0, pad))).astype(compute_dtype)
        self._w2p = jnp.pad(self.w2, ((0, pad), (0, pad))).astype(compute_dtype)
        self._bp = jnp.pad(self.b, (0, pad)).reshape(1, Np)   # kept f32

        self._prevp = None          # padded hidden state (Bp, Np) f32
        self._prev_batch = None

    def clear_memory(self):
        self._prevp = None
        self._prev_batch = None

    def __call__(self, x):
        single_step = x.ndim == 2
        xs = x[None] if single_step else x
        B = xs.shape[1]
        Bp = _round_up(B, _SUBLANE)
        if self._prevp is None or self._prev_batch != B:
            self._prevp = jnp.zeros((Bp, self._Np), jnp.float32)
            self._prev_batch = B
        outs, self._prevp = elman_sequence_padded(
            xs, self._prevp, self._w1p, self._w2p, self._bp,
            out_features=self.out_features)
        return outs[0] if single_step else outs


if __name__ == "__main__":
    key = jax.random.PRNGKey(0)
    k_param, k_seq, k_step = jax.random.split(key, 3)

    batch, in_features, out_features, seq_len = 8, 8, 32, 8

    xs = jax.random.normal(k_seq, (seq_len, batch, in_features), jnp.float32)
    x_extra = jax.random.normal(k_step, (batch, in_features), jnp.float32)
    HIGH = jax.lax.Precision.HIGHEST

    # ---- f32 compute path: checked against the exact f32 reference ----------
    layer32 = ElmanLayer(in_features, out_features, k_param,
                         compute_dtype=jnp.float32)
    outs32 = layer32(xs)              # whole sequence: one fused recurrence
    extra32 = layer32(x_extra)        # single step, carries state
    jax.block_until_ready(extra32)

    prev = jnp.zeros((batch, out_features), jnp.float32)
    refs = []
    for t in range(seq_len):
        prev = jnp.tanh(jnp.dot(xs[t], layer32.w1, precision=HIGH)
                        + jnp.dot(prev, layer32.w2, precision=HIGH) + layer32.b)
        refs.append(prev)
    refs = jnp.stack(refs)
    ref_extra = jnp.tanh(jnp.dot(x_extra, layer32.w1, precision=HIGH)
                         + jnp.dot(prev, layer32.w2, precision=HIGH) + layer32.b)

    assert outs32.shape == (seq_len, batch, out_features)
    # tolerance accounts for MXU f32 precision path + recurrent amplification
    assert jnp.allclose(outs32, refs, atol=5e-2), "f32 sequence mismatch"
    assert jnp.allclose(extra32, ref_extra, atol=5e-2), "f32 single-step mismatch"

    # ---- default bf16-MXU path: checked against a precision-matched ref -----
    layer16 = ElmanLayer(in_features, out_features, k_param)   # bf16 MXU
    outs16 = layer16(xs)
    jax.block_until_ready(outs16)

    bf = jnp.bfloat16
    w1b, w2b = layer16.w1.astype(bf), layer16.w2.astype(bf)
    prev = jnp.zeros((batch, out_features), jnp.float32)
    refs16 = []
    for t in range(seq_len):
        u_t = (jnp.dot(xs[t].astype(bf), w1b, preferred_element_type=jnp.float32)
               + layer16.b).astype(bf).astype(jnp.float32)
        d_t = jnp.dot(prev.astype(bf), w2b, preferred_element_type=jnp.float32)
        prev = jnp.tanh(u_t + d_t)
        refs16.append(prev)
    refs16 = jnp.stack(refs16)

    assert outs16.shape == (seq_len, batch, out_features)
    assert bool(jnp.all(jnp.isfinite(outs16)))
    assert jnp.allclose(outs16, refs16, atol=5e-2), "bf16 sequence mismatch"

    print("KERNEL_OK")
</pallas_src>

<mosaic_0001>
module attributes {stable_mosaic.version = 11 : i64} {
  func.func @_input_proj_kernel(%arg0: i32, %arg1: memref<128x8xf32, #tpu.memory_space<vmem>>, %arg2: memref<8x128xf32, #tpu.memory_space<vmem>>, %arg3: memref<1x128xf32, #tpu.memory_space<vmem>>, %arg4: memref<128x128xf32, #tpu.memory_space<vmem>>) attributes {dimension_semantics = [#tpu.dimension_semantics<parallel>], iteration_bounds = array<i64: 1>, scalar_prefetch = 0 : i64, scratch_operands = 0 : i64, tpu.core_type = #tpu.core_type<tc>, window_params = [{transform_indices = @transform_0, window_bounds = array<i64: 128, 8>}, {pipeline_mode = #tpu.pipeline_mode<synchronous>, transform_indices = @transform_1, window_bounds = array<i64: 8, 128>}, {pipeline_mode = #tpu.pipeline_mode<synchronous>, transform_indices = @transform_2, window_bounds = array<i64: 1, 128>}, {transform_indices = @transform_3, window_bounds = array<i64: 128, 128>}]} {
    %c0 = arith.constant 0 : index
    %c0_0 = arith.constant 0 : index
    %0 = vector.load %arg1[%c0, %c0_0] : memref<128x8xf32, #tpu.memory_space<vmem>>, vector<128x8xf32>
    %c0_1 = arith.constant 0 : index
    %c0_2 = arith.constant 0 : index
    %1 = vector.load %arg2[%c0_1, %c0_2] : memref<8x128xf32, #tpu.memory_space<vmem>>, vector<8x128xf32>
    %cst = arith.constant dense<0.000000e+00> : vector<128x128xf32>
    %2 = tpu.matmul %0, %1, %cst {dimension_numbers = #tpu.dot_dimension_numbers<[1], [0], [0], [1], [0, 0, 1, 1], [], []>} : vector<128x8xf32>, vector<8x128xf32>, vector<128x128xf32> -> vector<128x128xf32>
    %c0_3 = arith.constant 0 : index
    %c0_4 = arith.constant 0 : index
    %3 = vector.load %arg3[%c0_3, %c0_4] : memref<1x128xf32, #tpu.memory_space<vmem>>, vector<1x128xf32>
    %4 = vector.broadcast %3 : vector<1x128xf32> to vector<128x128xf32>
    %5 = arith.addf %2, %4 : vector<128x128xf32>
    %c0_5 = arith.constant 0 : index
    %c0_6 = arith.constant 0 : index
    %6 = vector.load %arg4[%c0_5, %c0_6] : memref<128x128xf32, #tpu.memory_space<vmem>>, vector<128x128xf32>
    tpu.vector_store %arg4[%c0_5, %c0_6], %5 {strides = array<i32>} : memref<128x128xf32, #tpu.memory_space<vmem>>, vector<128x128xf32>,
    return
  }
  func.func @transform_0(%arg0: i32) -> (i32, i32) {
    %c0_i32 = arith.constant 0 : i32
    %c0_i32_0 = arith.constant 0 : i32
    return %arg0, %c0_i32 : i32, i32
  }
  func.func @transform_1(%arg0: i32) -> (i32, i32) {
    %c0_i32 = arith.constant 0 : i32
    %c0_i32_0 = arith.constant 0 : i32
    %c0_i32_1 = arith.constant 0 : i32
    return %c0_i32, %c0_i32_0 : i32, i32
  }
  func.func @transform_2(%arg0: i32) -> (i32, i32) {
    %c0_i32 = arith.constant 0 : i32
    %c0_i32_0 = arith.constant 0 : i32
    %c0_i32_1 = arith.constant 0 : i32
    return %c0_i32, %c0_i32_0 : i32, i32
  }
  func.func @transform_3(%arg0: i32) -> (i32, i32) {
    %c0_i32 = arith.constant 0 : i32
    %c0_i32_0 = arith.constant 0 : i32
    return %arg0, %c0_i32 : i32, i32
  }
}

module attributes {stable_mosaic.version = 11 : i64} {
  func.func @_recurrence_kernel(%arg0: i32, %arg1: i32, %arg2: memref<8x16x128xf32, #tpu.memory_space<vmem>>, %arg3: memref<16x128xf32, #tpu.memory_space<vmem>>, %arg4: memref<128x128xf32, #tpu.memory_space<vmem>>, %arg5: memref<8x16x128xf32, #tpu.memory_space<vmem>>, %arg6: memref<16x128xf32, #tpu.memory_space<vmem>>) attributes {dimension_semantics = [#tpu.dimension_semantics<parallel>, #tpu.dimension_semantics<arbitrary>], iteration_bounds = array<i64: 1, 1>, scalar_prefetch = 0 : i64, scratch_operands = 1 : i64, tpu.core_type = #tpu.core_type<tc>, window_params = [{transform_indices = @transform_0, window_bounds = array<i64: 8, 16, 128>}, {transform_indices = @transform_1, window_bounds = array<i64: 16, 128>}, {pipeline_mode = #tpu.pipeline_mode<synchronous>, transform_indices = @transform_2, window_bounds = array<i64: 128, 128>}, {transform_indices = @transform_3, window_bounds = array<i64: 8, 16, 128>}]} {
    %c0_i32 = arith.constant 0 : i32
    %0 = arith.cmpi eq, %arg1, %c0_i32 : i32
    %1 = arith.extui %0 : i1 to i32
    %c0_i32_0 = arith.constant 0 : i32
    %2 = arith.cmpi ne, %1, %c0_i32_0 : i32
    scf.if %2 {
      %c0_88 = arith.constant 0 : index
      %c0_89 = arith.constant 0 : index
      %107 = vector.load %arg3[%c0_88, %c0_89] : memref<16x128xf32, #tpu.memory_space<vmem>>, vector<16x128xf32>
      %c0_90 = arith.constant 0 : index
      %c0_91 = arith.constant 0 : index
      %108 = vector.load %arg6[%c0_90, %c0_91] : memref<16x128xf32, #tpu.memory_space<vmem>>, vector<16x128xf32>
      tpu.vector_store %arg6[%c0_90, %c0_91], %107 {strides = array<i32>} : memref<16x128xf32, #tpu.memory_space<vmem>>, vector<16x128xf32>,
    } else {
    }
    %c0_i32_1 = arith.constant 0 : i32
    %c0 = arith.constant 0 : index
    %c0_2 = arith.constant 0 : index
    %3 = vector.load %arg6[%c0, %c0_2] : memref<16x128xf32, #tpu.memory_space<vmem>>, vector<16x128xf32>
    %c0_3 = arith.constant 0 : index
    %c0_4 = arith.constant 0 : index
    %4 = vector.load %arg4[%c0_3, %c0_4] : memref<128x128xf32, #tpu.memory_space<vmem>>, vector<128x128xf32>
    %cst = arith.constant dense<0.000000e+00> : vector<16x128xf32>
    %5 = tpu.matmul %3, %4, %cst {dimension_numbers = #tpu.dot_dimension_numbers<[1], [0], [0], [1], [0, 0, 1, 1], [], []>} : vector<16x128xf32>, vector<128x128xf32>, vector<16x128xf32> -> vector<16x128xf32>
    %6 = arith.index_cast %c0_i32_1 : i32 to index
    %c0_5 = arith.constant 0 : index
    %c0_6 = arith.constant 0 : index
    %7 = vector.load %arg2[%6, %c0_5, %c0_6] : memref<8x16x128xf32, #tpu.memory_space<vmem>>, vector<1x16x128xf32>
    %8 = vector.shape_cast %7 : vector<1x16x128xf32> to vector<16x128xf32>
    %9 = arith.addf %8, %5 : vector<16x128xf32>
    %10 = math.tanh %9 : vector<16x128xf32>
    %c0_7 = arith.constant 0 : index
    %c0_8 = arith.constant 0 : index
    %11 = vector.load %arg6[%c0_7, %c0_8] : memref<16x128xf32, #tpu.memory_space<vmem>>, vector<16x128xf32>
    tpu.vector_store %arg6[%c0_7, %c0_8], %10 {strides = array<i32>} : memref<16x128xf32, #tpu.memory_space<vmem>>, vector<16x128xf32>,
    %12 = arith.index_cast %c0_i32_1 : i32 to index
    %c0_9 = arith.constant 0 : index
    %c0_10 = arith.constant 0 : index
    %13 = vector.load %arg5[%12, %c0_9, %c0_10] : memref<8x16x128xf32, #tpu.memory_space<vmem>>, vector<1x16x128xf32>
    %14 = vector.shape_cast %13 : vector<1x16x128xf32> to vector<16x128xf32>
    %15 = vector.shape_cast %10 : vector<16x128xf32> to vector<1x16x128xf32>
    tpu.vector_store %arg5[%12, %c0_9, %c0_10], %15 {strides = array<i32>} : memref<8x16x128xf32, #tpu.memory_space<vmem>>, vector<1x16x128xf32>,
    %c1_i32 = arith.constant 1 : i32
    %c0_11 = arith.constant 0 : index
    %c0_12 = arith.constant 0 : index
    %16 = vector.load %arg6[%c0_11, %c0_12] : memref<16x128xf32, #tpu.memory_space<vmem>>, vector<16x128xf32>
    %c0_13 = arith.constant 0 : index
    %c0_14 = arith.constant 0 : index
    %17 = vector.load %arg4[%c0_13, %c0_14] : memref<128x128xf32, #tpu.memory_space<vmem>>, vector<128x128xf32>
    %cst_15 = arith.constant dense<0.000000e+00> : vector<16x128xf32>
    %18 = tpu.matmul %16, %17, %cst_15 {dimension_numbers = #tpu.dot_dimension_numbers<[1], [0], [0], [1], [0, 0, 1, 1], [], []>} : vector<16x128xf32>, vector<128x128xf32>, vector<16x128xf32> -> vector<16x128xf32>
    %19 = arith.index_cast %c1_i32 : i32 to index
    %c0_16 = arith.constant 0 : index
    %c0_17 = arith.constant 0 : index
    %20 = vector.load %arg2[%19, %c0_16, %c0_17] : memref<8x16x128xf32, #tpu.memory_space<vmem>>, vector<1x16x128xf32>
    %21 = vector.shape_cast %20 : vector<1x16x128xf32> to vector<16x128xf32>
    %22 = arith.addf %21, %18 : vector<16x128xf32>
    %23 = math.tanh %22 : vector<16x128xf32>
    %c0_18 = arith.constant 0 : index
    %c0_19 = arith.constant 0 : index
    %24 = vector.load %arg6[%c0_18, %c0_19] : memref<16x128xf32, #tpu.memory_space<vmem>>, vector<16x128xf32>
    tpu.vector_store %arg6[%c0_18, %c0_19], %23 {strides = array<i32>} : memref<16x128xf32, #tpu.memory_space<vmem>>, vector<16x128xf32>,
    %25 = arith.index_cast %c1_i32 : i32 to index
    %c0_20 = arith.constant 0 : index
    %c0_21 = arith.constant 0 : index
    %26 = vector.load %arg5[%25, %c0_20, %c0_21] : memref<8x16x128xf32, #tpu.memory_space<vmem>>, vector<1x16x128xf32>
    %27 = vector.shape_cast %26 : vector<1x16x128xf32> to vector<16x128xf32>
    %28 = vector.shape_cast %23 : vector<16x128xf32> to vector<1x16x128xf32>
    tpu.vector_store %arg5[%25, %c0_20, %c0_21], %28 {strides = array<i32>} : memref<8x16x128xf32, #tpu.memory_space<vmem>>, vector<1x16x128xf32>,
    %c2_i32 = arith.constant 2 : i32
    %c0_22 = arith.constant 0 : index
    %c0_23 = arith.constant 0 : index
    %29 = vector.load %arg6[%c0_22, %c0_23] : memref<16x128xf32, #tpu.memory_space<vmem>>, vector<16x128xf32>
    %c0_24 = arith.constant 0 : index
    %c0_25 = arith.constant 0 : index
    %30 = vector.load %arg4[%c0_24, %c0_25] : memref<128x128xf32, #tpu.memory_space<vmem>>, vector<128x128xf32>
    %cst_26 = arith.constant dense<0.000000e+00> : vector<16x128xf32>
    %31 = tpu.matmul %29, %30, %cst_26 {dimension_numbers = #tpu.dot_dimension_numbers<[1], [0], [0], [1], [0, 0, 1, 1], [], []>} : vector<16x128xf32>, vector<128x128xf32>, vector<16x128xf32> -> vector<16x128xf32>
    %32 = arith.index_cast %c2_i32 : i32 to index
    %c0_27 = arith.constant 0 : index
    %c0_28 = arith.constant 0 : index
    %33 = vector.load %arg2[%32, %c0_27, %c0_28] : memref<8x16x128xf32, #tpu.memory_space<vmem>>, vector<1x16x128xf32>
    %34 = vector.shape_cast %33 : vector<1x16x128xf32> to vector<16x128xf32>
    %35 = arith.addf %34, %31 : vector<16x128xf32>
    %36 = math.tanh %35 : vector<16x128xf32>
    %c0_29 = arith.constant 0 : index
    %c0_30 = arith.constant 0 : index
    %37 = vector.load %arg6[%c0_29, %c0_30] : memref<16x128xf32, #tpu.memory_space<vmem>>, vector<16x128xf32>
    tpu.vector_store %arg6[%c0_29, %c0_30], %36 {strides = array<i32>} : memref<16x128xf32, #tpu.memory_space<vmem>>, vector<16x128xf32>,
    %38 = arith.index_cast %c2_i32 : i32 to index
    %c0_31 = arith.constant 0 : index
    %c0_32 = arith.constant 0 : index
    %39 = vector.load %arg5[%38, %c0_31, %c0_32] : memref<8x16x128xf32, #tpu.memory_space<vmem>>, vector<1x16x128xf32>
    %40 = vector.shape_cast %39 : vector<1x16x128xf32> to vector<16x128xf32>
    %41 = vector.shape_cast %36 : vector<16x128xf32> to vector<1x16x128xf32>
    tpu.vector_store %arg5[%38, %c0_31, %c0_32], %41 {strides = array<i32>} : memref<8x16x128xf32, #tpu.memory_space<vmem>>, vector<1x16x128xf32>,
    %c3_i32 = arith.constant 3 : i32
    %c0_33 = arith.constant 0 : index
    %c0_34 = arith.constant 0 : index
    %42 = vector.load %arg6[%c0_33, %c0_34] : memref<16x128xf32, #tpu.memory_space<vmem>>, vector<16x128xf32>
    %c0_35 = arith.constant 0 : index
    %c0_36 = arith.constant 0 : index
    %43 = vector.load %arg4[%c0_35, %c0_36] : memref<128x128xf32, #tpu.memory_space<vmem>>, vector<128x128xf32>
    %cst_37 = arith.constant dense<0.000000e+00> : vector<16x128xf32>
    %44 = tpu.matmul %42, %43, %cst_37 {dimension_numbers = #tpu.dot_dimension_numbers<[1], [0], [0], [1], [0, 0, 1, 1], [], []>} : vector<16x128xf32>, vector<128x128xf32>, vector<16x128xf32> -> vector<16x128xf32>
    %45 = arith.index_cast %c3_i32 : i32 to index
    %c0_38 = arith.constant 0 : index
    %c0_39 = arith.constant 0 : index
    %46 = vector.load %arg2[%45, %c0_38, %c0_39] : memref<8x16x128xf32, #tpu.memory_space<vmem>>, vector<1x16x128xf32>
    %47 = vector.shape_cast %46 : vector<1x16x128xf32> to vector<16x128xf32>
    %48 = arith.addf %47, %44 : vector<16x128xf32>
    %49 = math.tanh %48 : vector<16x128xf32>
    %c0_40 = arith.constant 0 : index
    %c0_41 = arith.constant 0 : index
    %50 = vector.load %arg6[%c0_40, %c0_41] : memref<16x128xf32, #tpu.memory_space<vmem>>, vector<16x128xf32>
    tpu.vector_store %arg6[%c0_40, %c0_41], %49 {strides = array<i32>} : memref<16x128xf32, #tpu.memory_space<vmem>>, vector<16x128xf32>,
    %51 = arith.index_cast %c3_i32 : i32 to index
    %c0_42 = arith.constant 0 : index
    %c0_43 = arith.constant 0 : index
    %52 = vector.load %arg5[%51, %c0_42, %c0_43] : memref<8x16x128xf32, #tpu.memory_space<vmem>>, vector<1x16x128xf32>
    %53 = vector.shape_cast %52 : vector<1x16x128xf32> to vector<16x128xf32>
    %54 = vector.shape_cast %49 : vector<16x128xf32> to vector<1x16x128xf32>
    tpu.vector_store %arg5[%51, %c0_42, %c0_43], %54 {strides = array<i32>} : memref<8x16x128xf32, #tpu.memory_space<vmem>>, vector<1x16x128xf32>,
    %c4_i32 = arith.constant 4 : i32
    %c0_44 = arith.constant 0 : index
    %c0_45 = arith.constant 0 : index
    %55 = vector.load %arg6[%c0_44, %c0_45] : memref<16x128xf32, #tpu.memory_space<vmem>>, vector<16x128xf32>
    %c0_46 = arith.constant 0 : index
    %c0_47 = arith.constant 0 : index
    %56 = vector.load %arg4[%c0_46, %c0_47] : memref<128x128xf32, #tpu.memory_space<vmem>>, vector<128x128xf32>
    %cst_48 = arith.constant dense<0.000000e+00> : vector<16x128xf32>
    %57 = tpu.matmul %55, %56, %cst_48 {dimension_numbers = #tpu.dot_dimension_numbers<[1], [0], [0], [1], [0, 0, 1, 1], [], []>} : vector<16x128xf32>, vector<128x128xf32>, vector<16x128xf32> -> vector<16x128xf32>
    %58 = arith.index_cast %c4_i32 : i32 to index
    %c0_49 = arith.constant 0 : index
    %c0_50 = arith.constant 0 : index
    %59 = vector.load %arg2[%58, %c0_49, %c0_50] : memref<8x16x128xf32, #tpu.memory_space<vmem>>, vector<1x16x128xf32>
    %60 = vector.shape_cast %59 : vector<1x16x128xf32> to vector<16x128xf32>
    %61 = arith.addf %60, %57 : vector<16x128xf32>
    %62 = math.tanh %61 : vector<16x128xf32>
    %c0_51 = arith.constant 0 : index
    %c0_52 = arith.constant 0 : index
    %63 = vector.load %arg6[%c0_51, %c0_52] : memref<16x128xf32, #tpu.memory_space<vmem>>, vector<16x128xf32>
    tpu.vector_store %arg6[%c0_51, %c0_52], %62 {strides = array<i32>} : memref<16x128xf32, #tpu.memory_space<vmem>>, vector<16x128xf32>,
    %64 = arith.index_cast %c4_i32 : i32 to index
    %c0_53 = arith.constant 0 : index
    %c0_54 = arith.constant 0 : index
    %65 = vector.load %arg5[%64, %c0_53, %c0_54] : memref<8x16x128xf32, #tpu.memory_space<vmem>>, vector<1x16x128xf32>
    %66 = vector.shape_cast %65 : vector<1x16x128xf32> to vector<16x128xf32>
    %67 = vector.shape_cast %62 : vector<16x128xf32> to vector<1x16x128xf32>
    tpu.vector_store %arg5[%64, %c0_53, %c0_54], %67 {strides = array<i32>} : memref<8x16x128xf32, #tpu.memory_space<vmem>>, vector<1x16x128xf32>,
    %c5_i32 = arith.constant 5 : i32
    %c0_55 = arith.constant 0 : index
    %c0_56 = arith.constant 0 : index
    %68 = vector.load %arg6[%c0_55, %c0_56] : memref<16x128xf32, #tpu.memory_space<vmem>>, vector<16x128xf32>
    %c0_57 = arith.constant 0 : index
    %c0_58 = arith.constant 0 : index
    %69 = vector.load %arg4[%c0_57, %c0_58] : memref<128x128xf32, #tpu.memory_space<vmem>>, vector<128x128xf32>
    %cst_59 = arith.constant dense<0.000000e+00> : vector<16x128xf32>
    %70 = tpu.matmul %68, %69, %cst_59 {dimension_numbers = #tpu.dot_dimension_numbers<[1], [0], [0], [1], [0, 0, 1, 1], [], []>} : vector<16x128xf32>, vector<128x128xf32>, vector<16x128xf32> -> vector<16x128xf32>
    %71 = arith.index_cast %c5_i32 : i32 to index
    %c0_60 = arith.constant 0 : index
    %c0_61 = arith.constant 0 : index
    %72 = vector.load %arg2[%71, %c0_60, %c0_61] : memref<8x16x128xf32, #tpu.memory_space<vmem>>, vector<1x16x128xf32>
    %73 = vector.shape_cast %72 : vector<1x16x128xf32> to vector<16x128xf32>
    %74 = arith.addf %73, %70 : vector<16x128xf32>
    %75 = math.tanh %74 : vector<16x128xf32>
    %c0_62 = arith.constant 0 : index
    %c0_63 = arith.constant 0 : index
    %76 = vector.load %arg6[%c0_62, %c0_63] : memref<16x128xf32, #tpu.memory_space<vmem>>, vector<16x128xf32>
    tpu.vector_store %arg6[%c0_62, %c0_63], %75 {strides = array<i32>} : memref<16x128xf32, #tpu.memory_space<vmem>>, vector<16x128xf32>,
    %77 = arith.index_cast %c5_i32 : i32 to index
    %c0_64 = arith.constant 0 : index
    %c0_65 = arith.constant 0 : index
    %78 = vector.load %arg5[%77, %c0_64, %c0_65] : memref<8x16x128xf32, #tpu.memory_space<vmem>>, vector<1x16x128xf32>
    %79 = vector.shape_cast %78 : vector<1x16x128xf32> to vector<16x128xf32>
    %80 = vector.shape_cast %75 : vector<16x128xf32> to vector<1x16x128xf32>
    tpu.vector_store %arg5[%77, %c0_64, %c0_65], %80 {strides = array<i32>} : memref<8x16x128xf32, #tpu.memory_space<vmem>>, vector<1x16x128xf32>,
    %c6_i32 = arith.constant 6 : i32
    %c0_66 = arith.constant 0 : index
    %c0_67 = arith.constant 0 : index
    %81 = vector.load %arg6[%c0_66, %c0_67] : memref<16x128xf32, #tpu.memory_space<vmem>>, vector<16x128xf32>
    %c0_68 = arith.constant 0 : index
    %c0_69 = arith.constant 0 : index
    %82 = vector.load %arg4[%c0_68, %c0_69] : memref<128x128xf32, #tpu.memory_space<vmem>>, vector<128x128xf32>
    %cst_70 = arith.constant dense<0.000000e+00> : vector<16x128xf32>
    %83 = tpu.matmul %81, %82, %cst_70 {dimension_numbers = #tpu.dot_dimension_numbers<[1], [0], [0], [1], [0, 0, 1, 1], [], []>} : vector<16x128xf32>, vector<128x128xf32>, vector<16x128xf32> -> vector<16x128xf32>
    %84 = arith.index_cast %c6_i32 : i32 to index
    %c0_71 = arith.constant 0 : index
    %c0_72 = arith.constant 0 : index
    %85 = vector.load %arg2[%84, %c0_71, %c0_72] : memref<8x16x128xf32, #tpu.memory_space<vmem>>, vector<1x16x128xf32>
    %86 = vector.shape_cast %85 : vector<1x16x128xf32> to vector<16x128xf32>
    %87 = arith.addf %86, %83 : vector<16x128xf32>
    %88 = math.tanh %87 : vector<16x128xf32>
    %c0_73 = arith.constant 0 : index
    %c0_74 = arith.constant 0 : index
    %89 = vector.load %arg6[%c0_73, %c0_74] : memref<16x128xf32, #tpu.memory_space<vmem>>, vector<16x128xf32>
    tpu.vector_store %arg6[%c0_73, %c0_74], %88 {strides = array<i32>} : memref<16x128xf32, #tpu.memory_space<vmem>>, vector<16x128xf32>,
    %90 = arith.index_cast %c6_i32 : i32 to index
    %c0_75 = arith.constant 0 : index
    %c0_76 = arith.constant 0 : index
    %91 = vector.load %arg5[%90, %c0_75, %c0_76] : memref<8x16x128xf32, #tpu.memory_space<vmem>>, vector<1x16x128xf32>
    %92 = vector.shape_cast %91 : vector<1x16x128xf32> to vector<16x128xf32>
    %93 = vector.shape_cast %88 : vector<16x128xf32> to vector<1x16x128xf32>
    tpu.vector_store %arg5[%90, %c0_75, %c0_76], %93 {strides = array<i32>} : memref<8x16x128xf32, #tpu.memory_space<vmem>>, vector<1x16x128xf32>,
    %c7_i32 = arith.constant 7 : i32
    %c0_77 = arith.constant 0 : index
    %c0_78 = arith.constant 0 : index
    %94 = vector.load %arg6[%c0_77, %c0_78] : memref<16x128xf32, #tpu.memory_space<vmem>>, vector<16x128xf32>
    %c0_79 = arith.constant 0 : index
    %c0_80 = arith.constant 0 : index
    %95 = vector.load %arg4[%c0_79, %c0_80] : memref<128x128xf32, #tpu.memory_space<vmem>>, vector<128x128xf32>
    %cst_81 = arith.constant dense<0.000000e+00> : vector<16x128xf32>
    %96 = tpu.matmul %94, %95, %cst_81 {dimension_numbers = #tpu.dot_dimension_numbers<[1], [0], [0], [1], [0, 0, 1, 1], [], []>} : vector<16x128xf32>, vector<128x128xf32>, vector<16x128xf32> -> vector<16x128xf32>
    %97 = arith.index_cast %c7_i32 : i32 to index
    %c0_82 = arith.constant 0 : index
    %c0_83 = arith.constant 0 : index
    %98 = vector.load %arg2[%97, %c0_82, %c0_83] : memref<8x16x128xf32, #tpu.memory_space<vmem>>, vector<1x16x128xf32>
    %99 = vector.shape_cast %98 : vector<1x16x128xf32> to vector<16x128xf32>
    %100 = arith.addf %99, %96 : vector<16x128xf32>
    %101 = math.tanh %100 : vector<16x128xf32>
    %c0_84 = arith.constant 0 : index
    %c0_85 = arith.constant 0 : index
    %102 = vector.load %arg6[%c0_84, %c0_85] : memref<16x128xf32, #tpu.memory_space<vmem>>, vector<16x128xf32>
    tpu.vector_store %arg6[%c0_84, %c0_85], %101 {strides = array<i32>} : memref<16x128xf32, #tpu.memory_space<vmem>>, vector<16x128xf32>,
    %103 = arith.index_cast %c7_i32 : i32 to index
    %c0_86 = arith.constant 0 : index
    %c0_87 = arith.constant 0 : index
    %104 = vector.load %arg5[%103, %c0_86, %c0_87] : memref<8x16x128xf32, #tpu.memory_space<vmem>>, vector<1x16x128xf32>
    %105 = vector.shape_cast %104 : vector<1x16x128xf32> to vector<16x128xf32>
    %106 = vector.shape_cast %101 : vector<16x128xf32> to vector<1x16x128xf32>
    tpu.vector_store %arg5[%103, %c0_86, %c0_87], %106 {strides = array<i32>} : memref<8x16x128xf32, #tpu.memory_space<vmem>>, vector<1x16x128xf32>,
    %c8_i32 = arith.constant 8 : i32
    return
  }
  func.func @transform_0(%arg0: i32, %arg1: i32) -> (i32, i32, i32) {
    %c0_i32 = arith.constant 0 : i32
    %c0_i32_0 = arith.constant 0 : i32
    return %arg1, %arg0, %c0_i32 : i32, i32, i32
  }
  func.func @transform_1(%arg0: i32, %arg1: i32) -> (i32, i32) {
    %c0_i32 = arith.constant 0 : i32
    %c0_i32_0 = arith.constant 0 : i32
    return %arg0, %c0_i32 : i32, i32
  }
  func.func @transform_2(%arg0: i32, %arg1: i32) -> (i32, i32) {
    %c0_i32 = arith.constant 0 : i32
    %c0_i32_0 = arith.constant 0 : i32
    %c0_i32_1 = arith.constant 0 : i32
    return %c0_i32, %c0_i32_0 : i32, i32
  }
  func.func @transform_3(%arg0: i32, %arg1: i32) -> (i32, i32, i32) {
    %c0_i32 = arith.constant 0 : i32
    %c0_i32_0 = arith.constant 0 : i32
    return %arg1, %arg0, %c0_i32 : i32, i32, i32
  }
}

</mosaic_0001>

<llo_original>
// kernel: elman_sequence_padded.2
$region0: #{elman_sequence_padded.2}
  #allocation0 [shape = 'u32[]', space=smem, size = 0x4, offset = 0x4, fixed_abs, tag = 'smem constant byte address 0x4 - core index']
  #allocation1 [shape = 'u32[144,128]{1,0:T(1,128)}', space=vmem, size = 0x12000, scoped, tag = 'internal scratch']
  %s0 = inlined_call_operand.vmem [shape: f32[128,8], index: 0, kind: input, shape index: {}]
  %s1 = inlined_call_operand.vmem [shape: f32[8,128], index: 1, kind: input, shape index: {}]
  %s2 = inlined_call_operand.vmem [shape: f32[1,128], index: 2, kind: input, shape index: {}]
  %s3 = inlined_call_operand.vmem [shape: f32[128,128], index: 3, kind: output, shape index: {}]
  %s4 = sld [smem:[#allocation0]]
  $region22: #{elman_sequence_padded.2} parent=0
    _
  %s6 = ssub.s32 1, %s4
  %s7 = scalar_select 0, %s6, %s4
  // Predicated region
  $region2: #{elman_sequence_padded.2} parent=0 // pred_check
    _
  $region3: #{elman_sequence_padded.2} parent=0 // pred_check_branch
    %9 = sbr.rel (0) target = $region5
  $region4: #{elman_sequence_padded.2} parent=0 // pred_region
    _
  $region5: #{elman_sequence_padded.2} parent=0 // pred_fallthru
    _
  // Predicated region
  $region6: #{elman_sequence_padded.2} parent=0 // pred_check
    _
  $region7: #{elman_sequence_padded.2} parent=0 // pred_check_branch
    %11 = sbr.rel (0) target = $region9
  $region8: #{elman_sequence_padded.2} parent=0 // pred_region
    _
  $region9: #{elman_sequence_padded.2} parent=0 // pred_fallthru
    _
  // Predicated region
  $region10: #{elman_sequence_padded.2} parent=0 // pred_check
    _
  $region11: #{elman_sequence_padded.2} parent=0 // pred_check_branch
    %13 = sbr.rel (0) target = $region13
  $region12: #{elman_sequence_padded.2} parent=0 // pred_region
    _
  $region13: #{elman_sequence_padded.2} parent=0 // pred_fallthru
    _
  %v14 = vld [vmem:[%s0] sm:$0xff]
  %v15 = vld [vmem:[%s0 + $0x8] sm:$0xff]
  %v16 = vld [vmem:[%s0 + $0x10] sm:$0xff]
  %v17 = vld [vmem:[%s0 + $0x18] sm:$0xff]
  %v18 = vld [vmem:[%s0 + $0x20] sm:$0xff]
  %v19 = vld [vmem:[%s0 + $0x28] sm:$0xff]
  %v20 = vld [vmem:[%s0 + $0x30] sm:$0xff]
  %v21 = vld [vmem:[%s0 + $0x38] sm:$0xff]
  %v22 = vld [vmem:[%s0 + $0x40] sm:$0xff]
  %v23 = vld [vmem:[%s0 + $0x48] sm:$0xff]
  %v24 = vld [vmem:[%s0 + $0x50] sm:$0xff]
  %v25 = vld [vmem:[%s0 + $0x58] sm:$0xff]
  %v26 = vld [vmem:[%s0 + $0x60] sm:$0xff]
  %v27 = vld [vmem:[%s0 + $0x68] sm:$0xff]
  %v28 = vld [vmem:[%s0 + $0x70] sm:$0xff]
  %v29 = vld [vmem:[%s0 + $0x78] sm:$0xff]
  %v30 = vld [vmem:[%s1] sm:$0xff]
  %v31 = vld [vmem:[%s2] sm:$0x1]
  %v33 = vlaneseq
  %v34 = vshrl.u32 %v33, 7
  %v35 = vsub.s32 0, %v34
  %v36 = vrot.slane %v31, %v35
  %vm38 = vcmask 64512
  %v40 = vsel %vm38, %v14, 0
  %v43 = vsel %vm38, %v15, 0
  %v46 = vsel %vm38, %v16, 0
  %v49 = vsel %vm38, %v17, 0
  %v52 = vsel %vm38, %v18, 0
  %v55 = vsel %vm38, %v19, 0
  %v58 = vsel %vm38, %v20, 0
  %v61 = vsel %vm38, %v21, 0
  %v64 = vsel %vm38, %v22, 0
  %v67 = vsel %vm38, %v23, 0
  %v70 = vsel %vm38, %v24, 0
  %v73 = vsel %vm38, %v25, 0
  %v76 = vsel %vm38, %v26, 0
  %v79 = vsel %vm38, %v27, 0
  %v82 = vsel %vm38, %v28, 0
  %v85 = vsel %vm38, %v29, 0
  %87 = vmatprep.subr.mxu0 0.0
  %88 = vmatpush1.msra.mxu0 %v30
  %89 = vmatprep.subr.mxu0 0.0
  %90 = vmatpush1.msra.mxu0 0.0
  %91 = vmatprep.subr.mxu0 0.0
  %92 = vmatpush1.msra.mxu0 0.0
  %93 = vmatprep.subr.mxu0 0.0
  %94 = vmatpush1.msra.mxu0 0.0
  %95 = vmatprep.subr.mxu0 0.0
  %96 = vmatpush1.msra.mxu0 0.0
  %97 = vmatprep.subr.mxu0 0.0
  %98 = vmatpush1.msra.mxu0 0.0
  %99 = vmatprep.subr.mxu0 0.0
  %100 = vmatpush1.msra.mxu0 0.0
  %101 = vmatprep.subr.mxu0 0.0
  %102 = vmatpush1.msra.mxu0 0.0
  %103 = vmatprep.subr.mxu0 0.0
  %104 = vmatpush1.msra.mxu0 0.0
  %105 = vmatprep.subr.mxu0 0.0
  %106 = vmatpush1.msra.mxu0 0.0
  %107 = vmatprep.subr.mxu0 0.0
  %108 = vmatpush1.msra.mxu0 0.0
  %109 = vmatprep.subr.mxu0 0.0
  %110 = vmatpush1.msra.mxu0 0.0
  %111 = vmatprep.subr.mxu0 0.0
  %112 = vmatpush1.msra.mxu0 0.0
  %113 = vmatprep.subr.mxu0 0.0
  %114 = vmatpush1.msra.mxu0 0.0
  %115 = vmatprep.subr.mxu0 0.0
  %116 = vmatpush1.msra.mxu0 0.0
  %117 = vmatprep.subr.mxu0 0.0
  %118 = vmatpush1.msra.mxu0 0.0
  %119 = vmatprep.subr.mxu0 0.0
  %120 = vmatpush1.msra.mxu0 0.0
  %121 = vmatprep.subr.mxu0 0.0
  %122 = vmatpush1.msra.mxu0 0.0
  %123 = vmatprep.subr.mxu0 0.0
  %124 = vmatpush1.msra.mxu0 0.0
  %125 = vmatprep.subr.mxu0 0.0
  %126 = vmatpush1.msra.mxu0 0.0
  %127 = vmatprep.subr.mxu0 0.0
  %128 = vmatpush1.msra.mxu0 0.0
  %129 = vmatprep.subr.mxu0 0.0
  %130 = vmatpush1.msra.mxu0 0.0
  %131 = vmatprep.subr.mxu0 0.0
  %132 = vmatpush1.msra.mxu0 0.0
  %133 = vmatprep.subr.mxu0 0.0
  %134 = vmatpush1.msra.mxu0 0.0
  %135 = vmatprep.subr.mxu0 0.0
  %136 = vmatpush1.msra.mxu0 0.0
  %137 = vmatprep.subr.mxu0 0.0
  %138 = vmatpush1.msra.mxu0 0.0
  %139 = vmatprep.subr.mxu0 0.0
  %140 = vmatpush1.msra.mxu0 0.0
  %141 = vmatprep.subr.mxu0 0.0
  %142 = vmatpush1.msra.mxu0 0.0
  %143 = vmatprep.subr.mxu0 0.0
  %144 = vmatpush1.msra.mxu0 0.0
  %145 = vmatprep.subr.mxu0 0.0
  %146 = vmatpush1.msra.mxu0 0.0
  %147 = vmatprep.subr.mxu0 0.0
  %148 = vmatpush1.msra.mxu0 0.0
  %149 = vmatprep.subr.mxu0 0.0
  %150 = vmatpush1.msra.mxu0 0.0
  %151 = vmatprep.mubr.f32.mxu0 0.0
  %152 = vmatmul.mubr.f32.gmra.mrb[0].mxu0 %v40
  %v153 = vpop.f32.mrb[0].mxu0
  %v154 = vadd.f32 %v36, %v153
  %v155 = vpop.f32.mrb[0].mxu0
  %156 = vmatprep.mubr.f32.mxu0 0.0
  %157 = vmatmul.mubr.f32.gmra.mrb[0].mxu0 %v43
  %v158 = vpop.f32.mrb[0].mxu0
  %v159 = vadd.f32 %v36, %v158
  %v160 = vpop.f32.mrb[0].mxu0
  %161 = vmatprep.mubr.f32.mxu0 0.0
  %162 = vmatmul.mubr.f32.gmra.mrb[0].mxu0 %v46
  %v163 = vpop.f32.mrb[0].mxu0
  %v164 = vadd.f32 %v36, %v163
  %v165 = vpop.f32.mrb[0].mxu0
  %166 = vmatprep.mubr.f32.mxu0 0.0
  %167 = vmatmul.mubr.f32.gmra.mrb[0].mxu0 %v49
  %v168 = vpop.f32.mrb[0].mxu0
  %v169 = vadd.f32 %v36, %v168
  %v170 = vpop.f32.mrb[0].mxu0
  %171 = vmatprep.mubr.f32.mxu0 0.0
  %172 = vmatmul.mubr.f32.gmra.mrb[0].mxu0 %v52
  %v173 = vpop.f32.mrb[0].mxu0
  %v174 = vadd.f32 %v36, %v173
  %v175 = vpop.f32.mrb[0].mxu0
  %176 = vmatprep.mubr.f32.mxu0 0.0
  %177 = vmatmul.mubr.f32.gmra.mrb[0].mxu0 %v55
  %v178 = vpop.f32.mrb[0].mxu0
  %v179 = vadd.f32 %v36, %v178
  %v180 = vpop.f32.mrb[0].mxu0
  %181 = vmatprep.mubr.f32.mxu0 0.0
  %182 = vmatmul.mubr.f32.gmra.mrb[0].mxu0 %v58
  %v183 = vpop.f32.mrb[0].mxu0
  %v184 = vadd.f32 %v36, %v183
  %v185 = vpop.f32.mrb[0].mxu0
  %186 = vmatprep.mubr.f32.mxu0 0.0
  %187 = vmatmul.mubr.f32.gmra.mrb[0].mxu0 %v61
  %v188 = vpop.f32.mrb[0].mxu0
  %v189 = vadd.f32 %v36, %v188
  %v190 = vpop.f32.mrb[0].mxu0
  %191 = vmatprep.mubr.f32.mxu0 0.0
  %192 = vmatmul.mubr.f32.gmra.mrb[0].mxu0 %v64
  %v193 = vpop.f32.mrb[0].mxu0
  %v194 = vadd.f32 %v36, %v193
  %v195 = vpop.f32.mrb[0].mxu0
  %196 = vmatprep.mubr.f32.mxu0 0.0
  %197 = vmatmul.mubr.f32.gmra.mrb[0].mxu0 %v67
  %v198 = vpop.f32.mrb[0].mxu0
  %v199 = vadd.f32 %v36, %v198
  %v200 = vpop.f32.mrb[0].mxu0
  %201 = vmatprep.mubr.f32.mxu0 0.0
  %202 = vmatmul.mubr.f32.gmra.mrb[0].mxu0 %v70
  %v203 = vpop.f32.mrb[0].mxu0
  %v204 = vadd.f32 %v36, %v203
  %v205 = vpop.f32.mrb[0].mxu0
  %206 = vmatprep.mubr.f32.mxu0 0.0
  %207 = vmatmul.mubr.f32.gmra.mrb[0].mxu0 %v73
  %v208 = vpop.f32.mrb[0].mxu0
  %v209 = vadd.f32 %v36, %v208
  %v210 = vpop.f32.mrb[0].mxu0
  %211 = vmatprep.mubr.f32.mxu0 0.0
  %212 = vmatmul.mubr.f32.gmra.mrb[0].mxu0 %v76
  %v213 = vpop.f32.mrb[0].mxu0
  %v214 = vadd.f32 %v36, %v213
  %v215 = vpop.f32.mrb[0].mxu0
  %216 = vmatprep.mubr.f32.mxu0 0.0
  %217 = vmatmul.mubr.f32.gmra.mrb[0].mxu0 %v79
  %v218 = vpop.f32.mrb[0].mxu0
  %v219 = vadd.f32 %v36, %v218
  %v220 = vpop.f32.mrb[0].mxu0
  %221 = vmatprep.mubr.f32.mxu0 0.0
  %222 = vmatmul.mubr.f32.gmra.mrb[0].mxu0 %v82
  %v223 = vpop.f32.mrb[0].mxu0
  %v224 = vadd.f32 %v36, %v223
  %v225 = vpop.f32.mrb[0].mxu0
  %226 = vmatprep.mubr.f32.mxu0 0.0
  %227 = vmatmul.mubr.f32.gmra.mrb[0].mxu0 %v85
  %v228 = vpop.f32.mrb[0].mxu0
  %v229 = vadd.f32 %v36, %v228
  %v230 = vpop.f32.mrb[0].mxu0
  %231 = vdwg.mxu0
  %232 = vst [vmem:[%s3] sm:$0xff] %v154
  %233 = vst [vmem:[%s3 + $0x8] sm:$0xff] %v159
  %234 = vst [vmem:[%s3 + $0x10] sm:$0xff] %v164
  %235 = vst [vmem:[%s3 + $0x18] sm:$0xff] %v169
  %236 = vst [vmem:[%s3 + $0x20] sm:$0xff] %v174
  %237 = vst [vmem:[%s3 + $0x28] sm:$0xff] %v179
  %238 = vst [vmem:[%s3 + $0x30] sm:$0xff] %v184
  %239 = vst [vmem:[%s3 + $0x38] sm:$0xff] %v189
  %240 = vst [vmem:[%s3 + $0x40] sm:$0xff] %v194
  %241 = vst [vmem:[%s3 + $0x48] sm:$0xff] %v199
  %242 = vst [vmem:[%s3 + $0x50] sm:$0xff] %v204
  %243 = vst [vmem:[%s3 + $0x58] sm:$0xff] %v209
  %244 = vst [vmem:[%s3 + $0x60] sm:$0xff] %v214
  %245 = vst [vmem:[%s3 + $0x68] sm:$0xff] %v219
  %246 = vst [vmem:[%s3 + $0x70] sm:$0xff] %v224
  %247 = vst [vmem:[%s3 + $0x78] sm:$0xff] %v229
  // Predicated region
  $region14: #{elman_sequence_padded.2} parent=0 // pred_check
    _
  $region15: #{elman_sequence_padded.2} parent=0 // pred_check_branch
    %249 = sbr.rel (0) target = $region17
  $region16: #{elman_sequence_padded.2} parent=0 // pred_region
    _
  $region17: #{elman_sequence_padded.2} parent=0 // pred_fallthru
    _
  // Predicated region
  $region18: #{elman_sequence_padded.2} parent=0 // pred_check
    _
  $region19: #{elman_sequence_padded.2} parent=0 // pred_check_branch
    %251 = sbr.rel (0) target = $region21
  $region20: #{elman_sequence_padded.2} parent=0 // pred_region
    _
  $region21: #{elman_sequence_padded.2} parent=0 // pred_fallthru
    _

// kernel: elman_sequence_padded.3
$region0: #{elman_sequence_padded.3}
  #allocation0 [shape = 'u32[]', space=smem, size = 0x4, offset = 0x4, fixed_abs, tag = 'smem constant byte address 0x4 - core index']
  #allocation1 [shape = 'u32[144,128]{1,0:T(1,128)}', space=vmem, size = 0x12000, scoped, tag = 'internal scratch']
  #allocation2 [shape = 'f32[16,128]{1,0:T(8,128)}', space=vmem, size = 0x2000, scoped, tag = 'scratch operand']
  %s0 = inlined_call_operand.vmem [shape: f32[8,16,128], index: 0, kind: input, shape index: {}]
  %s1 = inlined_call_operand.vmem [shape: f32[16,128], index: 1, kind: input, shape index: {}]
  %s2 = inlined_call_operand.vmem [shape: f32[128,128], index: 2, kind: input, shape index: {}]
  %s3 = inlined_call_operand.vmem [shape: f32[8,16,128], index: 3, kind: output, shape index: {}]
  %s4 = sld [smem:[#allocation0]]
  $region26: #{elman_sequence_padded.3} parent=0
    _
  %s6 = ssub.s32 1, %s4
  %s7 = scalar_select 0, %s6, %s4
  // Predicated region
  $region2: #{elman_sequence_padded.3} parent=0 // pred_check
    _
  $region3: #{elman_sequence_padded.3} parent=0 // pred_check_branch
    %9 = sbr.rel (0) target = $region5
  $region4: #{elman_sequence_padded.3} parent=0 // pred_region
    _
  $region5: #{elman_sequence_padded.3} parent=0 // pred_fallthru
    _
  // Predicated region
  $region6: #{elman_sequence_padded.3} parent=0 // pred_check
    _
  $region7: #{elman_sequence_padded.3} parent=0 // pred_check_branch
    %11 = sbr.rel (0) target = $region9
  $region8: #{elman_sequence_padded.3} parent=0 // pred_region
    _
  $region9: #{elman_sequence_padded.3} parent=0 // pred_fallthru
    _
  // Predicated region
  $region10: #{elman_sequence_padded.3} parent=0 // pred_check
    _
  $region11: #{elman_sequence_padded.3} parent=0 // pred_check_branch
    %13 = sbr.rel (0) target = $region13
  $region12: #{elman_sequence_padded.3} parent=0 // pred_region
    _
  $region13: #{elman_sequence_padded.3} parent=0 // pred_fallthru
    _
  %p14 = scmp.eq.s32.totalorder 0, 0
  // Predicated region
  $region14: #{elman_sequence_padded.3} parent=0 // pred_check
    %p15 = pneg %p14
  $region15: #{elman_sequence_padded.3} parent=0 // pred_check_branch
    %17 = sbr.rel (%p15) target = $region17
  $region16: #{elman_sequence_padded.3} parent=0 // pred_region
    %v18 = vld [vmem:[%s1] sm:$0xff]
    %v19 = vld [vmem:[%s1 + $0x8] sm:$0xff]
    %20 = vst [vmem:[#allocation2] sm:$0xff] %v18
    %21 = vst [vmem:[#allocation2 + $0x8] sm:$0xff] %v19
  $region17: #{elman_sequence_padded.3} parent=0 // pred_fallthru
    _
  %v22 = vld [vmem:[#allocation2] sm:$0xff]
  %v23 = vld [vmem:[#allocation2 + $0x8] sm:$0xff]
  %v24 = vld [vmem:[%s2] sm:$0xff]
  %v25 = vld [vmem:[%s2 + $0x8] sm:$0xff]
  %v26 = vld [vmem:[%s2 + $0x10] sm:$0xff]
  %v27 = vld [vmem:[%s2 + $0x18] sm:$0xff]
  %v28 = vld [vmem:[%s2 + $0x20] sm:$0xff]
  %v29 = vld [vmem:[%s2 + $0x28] sm:$0xff]
  %v30 = vld [vmem:[%s2 + $0x30] sm:$0xff]
  %v31 = vld [vmem:[%s2 + $0x38] sm:$0xff]
  %v32 = vld [vmem:[%s2 + $0x40] sm:$0xff]
  %v33 = vld [vmem:[%s2 + $0x48] sm:$0xff]
  %v34 = vld [vmem:[%s2 + $0x50] sm:$0xff]
  %v35 = vld [vmem:[%s2 + $0x58] sm:$0xff]
  %v36 = vld [vmem:[%s2 + $0x60] sm:$0xff]
  %v37 = vld [vmem:[%s2 + $0x68] sm:$0xff]
  %v38 = vld [vmem:[%s2 + $0x70] sm:$0xff]
  %v39 = vld [vmem:[%s2 + $0x78] sm:$0xff]
  %40 = vmatprep.subr.mxu0 0.0
  %41 = vmatpush1.msra.mxu0 %v24
  %42 = vmatprep.subr.mxu0 0.0
  %43 = vmatpush1.msra.mxu0 %v25
  %44 = vmatprep.subr.mxu0 0.0
  %45 = vmatpush1.msra.mxu0 %v26
  %46 = vmatprep.subr.mxu0 0.0
  %47 = vmatpush1.msra.mxu0 %v27
  %48 = vmatprep.subr.mxu0 0.0
  %49 = vmatpush1.msra.mxu0 %v28
  %50 = vmatprep.subr.mxu0 0.0
  %51 = vmatpush1.msra.mxu0 %v29
  %52 = vmatprep.subr.mxu0 0.0
  %53 = vmatpush1.msra.mxu0 %v30
  %54 = vmatprep.subr.mxu0 0.0
  %55 = vmatpush1.msra.mxu0 %v31
  %56 = vmatprep.subr.mxu0 0.0
  %57 = vmatpush1.msra.mxu0 %v32
  %58 = vmatprep.subr.mxu0 0.0
  %59 = vmatpush1.msra.mxu0 %v33
  %60 = vmatprep.subr.mxu0 0.0
  %61 = vmatpush1.msra.mxu0 %v34
  %62 = vmatprep.subr.mxu0 0.0
  %63 = vmatpush1.msra.mxu0 %v35
  %64 = vmatprep.subr.mxu0 0.0
  %65 = vmatpush1.msra.mxu0 %v36
  %66 = vmatprep.subr.mxu0 0.0
  %67 = vmatpush1.msra.mxu0 %v37
  %68 = vmatprep.subr.mxu0 0.0
  %69 = vmatpush1.msra.mxu0 %v38
  %70 = vmatprep.subr.mxu0 0.0
  %71 = vmatpush1.msra.mxu0 %v39
  %72 = vmatprep.subr.mxu0 0.0
  %73 = vmatpush1.msra.mxu0 0.0
  %74 = vmatprep.subr.mxu0 0.0
  %75 = vmatpush1.msra.mxu0 0.0
  %76 = vmatprep.subr.mxu0 0.0
  %77 = vmatpush1.msra.mxu0 0.0
  %78 = vmatprep.subr.mxu0 0.0
  %79 = vmatpush1.msra.mxu0 0.0
  %80 = vmatprep.subr.mxu0 0.0
  %81 = vmatpush1.msra.mxu0 0.0
  %82 = vmatprep.subr.mxu0 0.0
  %83 = vmatpush1.msra.mxu0 0.0
  %84 = vmatprep.subr.mxu0 0.0
  %85 = vmatpush1.msra.mxu0 0.0
  %86 = vmatprep.subr.mxu0 0.0
  %87 = vmatpush1.msra.mxu0 0.0
  %88 = vmatprep.subr.mxu0 0.0
  %89 = vmatpush1.msra.mxu0 0.0
  %90 = vmatprep.subr.mxu0 0.0
  %91 = vmatpush1.msra.mxu0 0.0
  %92 = vmatprep.subr.mxu0 0.0
  %93 = vmatpush1.msra.mxu0 0.0
  %94 = vmatprep.subr.mxu0 0.0
  %95 = vmatpush1.msra.mxu0 0.0
  %96 = vmatprep.subr.mxu0 0.0
  %97 = vmatpush1.msra.mxu0 0.0
  %98 = vmatprep.subr.mxu0 0.0
  %99 = vmatpush1.msra.mxu0 0.0
  %100 = vmatprep.subr.mxu0 0.0
  %101 = vmatpush1.msra.mxu0 0.0
  %102 = vmatprep.subr.mxu0 0.0
  %103 = vmatpush1.msra.mxu0 0.0
  %104 = vmatprep.mubr.f32.mxu0 0.0
  %105 = vmatmul.mubr.f32.gmra.mrb[0].mxu0 %v22
  %v106 = vpop.f32.mrb[0].mxu0
  %v107 = vadd.f32 0.0, %v106
  %v108 = vpop.f32.mrb[0].mxu0
  %109 = vmatprep.mubr.f32.mxu0 0.0
  %110 = vmatmul.mubr.f32.gmra.mrb[0].mxu0 %v23
  %v111 = vpop.f32.mrb[0].mxu0
  %v112 = vadd.f32 0.0, %v111
  %v113 = vpop.f32.mrb[0].mxu0
  %114 = vdwg.mxu0
  %v115 = vld [vmem:[%s0] sm:$0xff]
  %v116 = vld [vmem:[%s0 + $0x8] sm:$0xff]
  %v117 = vadd.f32 %v115, %v107
  %v118 = vadd.f32 %v116, %v112
  %v119 = vtanh.pop %v117
  %v120 = vtanh.pop %v118
  %121 = vst [vmem:[#allocation2] sm:$0xff] %v119
  %122 = vst [vmem:[#allocation2 + $0x8] sm:$0xff] %v120
  %123 = vst [vmem:[%s3] sm:$0xff] %v119
  %124 = vst [vmem:[%s3 + $0x8] sm:$0xff] %v120
  %v125 = vld [vmem:[#allocation2] sm:$0xff]
  %v126 = vld [vmem:[#allocation2 + $0x8] sm:$0xff]
  %v127 = vld [vmem:[%s2] sm:$0xff]
  %v128 = vld [vmem:[%s2 + $0x8] sm:$0xff]
  %v129 = vld [vmem:[%s2 + $0x10] sm:$0xff]
  %v130 = vld [vmem:[%s2 + $0x18] sm:$0xff]
  %v131 = vld [vmem:[%s2 + $0x20] sm:$0xff]
  %v132 = vld [vmem:[%s2 + $0x28] sm:$0xff]
  %v133 = vld [vmem:[%s2 + $0x30] sm:$0xff]
  %v134 = vld [vmem:[%s2 + $0x38] sm:$0xff]
  %v135 = vld [vmem:[%s2 + $0x40] sm:$0xff]
  %v136 = vld [vmem:[%s2 + $0x48] sm:$0xff]
  %v137 = vld [vmem:[%s2 + $0x50] sm:$0xff]
  %v138 = vld [vmem:[%s2 + $0x58] sm:$0xff]
  %v139 = vld [vmem:[%s2 + $0x60] sm:$0xff]
  %v140 = vld [vmem:[%s2 + $0x68] sm:$0xff]
  %v141 = vld [vmem:[%s2 + $0x70] sm:$0xff]
  %v142 = vld [vmem:[%s2 + $0x78] sm:$0xff]
  %143 = vmatprep.subr.mxu0 0.0
  %144 = vmatpush1.msra.mxu0 %v127
  %145 = vmatprep.subr.mxu0 0.0
  %146 = vmatpush1.msra.mxu0 %v128
  %147 = vmatprep.subr.mxu0 0.0
  %148 = vmatpush1.msra.mxu0 %v129
  %149 = vmatprep.subr.mxu0 0.0
  %150 = vmatpush1.msra.mxu0 %v130
  %151 = vmatprep.subr.mxu0 0.0
  %152 = vmatpush1.msra.mxu0 %v131
  %153 = vmatprep.subr.mxu0 0.0
  %154 = vmatpush1.msra.mxu0 %v132
  %155 = vmatprep.subr.mxu0 0.0
  %156 = vmatpush1.msra.mxu0 %v133
  %157 = vmatprep.subr.mxu0 0.0
  %158 = vmatpush1.msra.mxu0 %v134
  %159 = vmatprep.subr.mxu0 0.0
  %160 = vmatpush1.msra.mxu0 %v135
  %161 = vmatprep.subr.mxu0 0.0
  %162 = vmatpush1.msra.mxu0 %v136
  %163 = vmatprep.subr.mxu0 0.0
  %164 = vmatpush1.msra.mxu0 %v137
  %165 = vmatprep.subr.mxu0 0.0
  %166 = vmatpush1.msra.mxu0 %v138
  %167 = vmatprep.subr.mxu0 0.0
  %168 = vmatpush1.msra.mxu0 %v139
  %169 = vmatprep.subr.mxu0 0.0
  %170 = vmatpush1.msra.mxu0 %v140
  %171 = vmatprep.subr.mxu0 0.0
  %172 = vmatpush1.msra.mxu0 %v141
  %173 = vmatprep.subr.mxu0 0.0
  %174 = vmatpush1.msra.mxu0 %v142
  %175 = vmatprep.subr.mxu0 0.0
  %176 = vmatpush1.msra.mxu0 0.0
  %177 = vmatprep.subr.mxu0 0.0
  %178 = vmatpush1.msra.mxu0 0.0
  %179 = vmatprep.subr.mxu0 0.0
  %180 = vmatpush1.msra.mxu0 0.0
  %181 = vmatprep.subr.mxu0 0.0
  %182 = vmatpush1.msra.mxu0 0.0
  %183 = vmatprep.subr.mxu0 0.0
  %184 = vmatpush1.msra.mxu0 0.0
  %185 = vmatprep.subr.mxu0 0.0
  %186 = vmatpush1.msra.mxu0 0.0
  %187 = vmatprep.subr.mxu0 0.0
  %188 = vmatpush1.msra.mxu0 0.0
  %189 = vmatprep.subr.mxu0 0.0
  %190 = vmatpush1.msra.mxu0 0.0
  %191 = vmatprep.subr.mxu0 0.0
  %192 = vmatpush1.msra.mxu0 0.0
  %193 = vmatprep.subr.mxu0 0.0
  %194 = vmatpush1.msra.mxu0 0.0
  %195 = vmatprep.subr.mxu0 0.0
  %196 = vmatpush1.msra.mxu0 0.0
  %197 = vmatprep.subr.mxu0 0.0
  %198 = vmatpush1.msra.mxu0 0.0
  %199 = vmatprep.subr.mxu0 0.0
  %200 = vmatpush1.msra.mxu0 0.0
  %201 = vmatprep.subr.mxu0 0.0
  %202 = vmatpush1.msra.mxu0 0.0
  %203 = vmatprep.subr.mxu0 0.0
  %204 = vmatpush1.msra.mxu0 0.0
  %205 = vmatprep.subr.mxu0 0.0
  %206 = vmatpush1.msra.mxu0 0.0
  %207 = vmatprep.mubr.f32.mxu0 0.0
  %208 = vmatmul.mubr.f32.gmra.mrb[0].mxu0 %v125
  %v209 = vpop.f32.mrb[0].mxu0
  %v210 = vadd.f32 0.0, %v209
  %v211 = vpop.f32.mrb[0].mxu0
  %212 = vmatprep.mubr.f32.mxu0 0.0
  %213 = vmatmul.mubr.f32.gmra.mrb[0].mxu0 %v126
  %v214 = vpop.f32.mrb[0].mxu0
  %v215 = vadd.f32 0.0, %v214
  %v216 = vpop.f32.mrb[0].mxu0
  %217 = vdwg.mxu0
  %s218 = scalar_lea.vmem %s0, 16
  %v219 = vld [vmem:[%s218] sm:$0xff]
  %v220 = vld [vmem:[%s218 + $0x8] sm:$0xff]
  %v221 = vadd.f32 %v219, %v210
  %v222 = vadd.f32 %v220, %v215
  %v223 = vtanh.pop %v221
  %v224 = vtanh.pop %v222
  %225 = vst [vmem:[#allocation2] sm:$0xff] %v223
  %226 = vst [vmem:[#allocation2 + $0x8] sm:$0xff] %v224
  %s227 = scalar_lea.vmem %s3, 16
  %228 = vst [vmem:[%s227] sm:$0xff] %v223
  %229 = vst [vmem:[%s227 + $0x8] sm:$0xff] %v224
  %v230 = vld [vmem:[#allocation2] sm:$0xff]
  %v231 = vld [vmem:[#allocation2 + $0x8] sm:$0xff]
  %v232 = vld [vmem:[%s2] sm:$0xff]
  %v233 = vld [vmem:[%s2 + $0x8] sm:$0xff]
  %v234 = vld [vmem:[%s2 + $0x10] sm:$0xff]
  %v235 = vld [vmem:[%s2 + $0x18] sm:$0xff]
  %v236 = vld [vmem:[%s2 + $0x20] sm:$0xff]
  %v237 = vld [vmem:[%s2 + $0x28] sm:$0xff]
  %v238 = vld [vmem:[%s2 + $0x30] sm:$0xff]
  %v239 = vld [vmem:[%s2 + $0x38] sm:$0xff]
  %v240 = vld [vmem:[%s2 + $0x40] sm:$0xff]
  %v241 = vld [vmem:[%s2 + $0x48] sm:$0xff]
  %v242 = vld [vmem:[%s2 + $0x50] sm:$0xff]
  %v243 = vld [vmem:[%s2 + $0x58] sm:$0xff]
  %v244 = vld [vmem:[%s2 + $0x60] sm:$0xff]
  %v245 = vld [vmem:[%s2 + $0x68] sm:$0xff]
  %v246 = vld [vmem:[%s2 + $0x70] sm:$0xff]
  %v247 = vld [vmem:[%s2 + $0x78] sm:$0xff]
  %248 = vmatprep.subr.mxu0 0.0
  %249 = vmatpush1.msra.mxu0 %v232
  %250 = vmatprep.subr.mxu0 0.0
  %251 = vmatpush1.msra.mxu0 %v233
  %252 = vmatprep.subr.mxu0 0.0
  %253 = vmatpush1.msra.mxu0 %v234
  %254 = vmatprep.subr.mxu0 0.0
  %255 = vmatpush1.msra.mxu0 %v235
  %256 = vmatprep.subr.mxu0 0.0
  %257 = vmatpush1.msra.mxu0 %v236
  %258 = vmatprep.subr.mxu0 0.0
  %259 = vmatpush1.msra.mxu0 %v237
  %260 = vmatprep.subr.mxu0 0.0
  %261 = vmatpush1.msra.mxu0 %v238
  %262 = vmatprep.subr.mxu0 0.0
  %263 = vmatpush1.msra.mxu0 %v239
  %264 = vmatprep.subr.mxu0 0.0
  %265 = vmatpush1.msra.mxu0 %v240
  %266 = vmatprep.subr.mxu0 0.0
  %267 = vmatpush1.msra.mxu0 %v241
  %268 = vmatprep.subr.mxu0 0.0
  %269 = vmatpush1.msra.mxu0 %v242
  %270 = vmatprep.subr.mxu0 0.0
  %271 = vmatpush1.msra.mxu0 %v243
  %272 = vmatprep.subr.mxu0 0.0
  %273 = vmatpush1.msra.mxu0 %v244
  %274 = vmatprep.subr.mxu0 0.0
  %275 = vmatpush1.msra.mxu0 %v245
  %276 = vmatprep.subr.mxu0 0.0
  %277 = vmatpush1.msra.mxu0 %v246
  %278 = vmatprep.subr.mxu0 0.0
  %279 = vmatpush1.msra.mxu0 %v247
  %280 = vmatprep.subr.mxu0 0.0
  %281 = vmatpush1.msra.mxu0 0.0
  %282 = vmatprep.subr.mxu0 0.0
  %283 = vmatpush1.msra.mxu0 0.0
  %284 = vmatprep.subr.mxu0 0.0
  %285 = vmatpush1.msra.mxu0 0.0
  %286 = vmatprep.subr.mxu0 0.0
  %287 = vmatpush1.msra.mxu0 0.0
  %288 = vmatprep.subr.mxu0 0.0
  %289 = vmatpush1.msra.mxu0 0.0
  %290 = vmatprep.subr.mxu0 0.0
  %291 = vmatpush1.msra.mxu0 0.0
  %292 = vmatprep.subr.mxu0 0.0
  %293 = vmatpush1.msra.mxu0 0.0
  %294 = vmatprep.subr.mxu0 0.0
  %295 = vmatpush1.msra.mxu0 0.0
  %296 = vmatprep.subr.mxu0 0.0
  %297 = vmatpush1.msra.mxu0 0.0
  %298 = vmatprep.subr.mxu0 0.0
  %299 = vmatpush1.msra.mxu0 0.0
  %300 = vmatprep.subr.mxu0 0.0
  %301 = vmatpush1.msra.mxu0 0.0
  %302 = vmatprep.subr.mxu0 0.0
  %303 = vmatpush1.msra.mxu0 0.0
  %304 = vmatprep.subr.mxu0 0.0
  %305 = vmatpush1.msra.mxu0 0.0
  %306 = vmatprep.subr.mxu0 0.0
  %307 = vmatpush1.msra.mxu0 0.0
  %308 = vmatprep.subr.mxu0 0.0
  %309 = vmatpush1.msra.mxu0 0.0
  %310 = vmatprep.subr.mxu0 0.0
  %311 = vmatpush1.msra.mxu0 0.0
  %312 = vmatprep.mubr.f32.mxu0 0.0
  %313 = vmatmul.mubr.f32.gmra.mrb[0].mxu0 %v230
  %v314 = vpop.f32.mrb[0].mxu0
  %v315 = vadd.f32 0.0, %v314
  %v316 = vpop.f32.mrb[0].mxu0
  %317 = vmatprep.mubr.f32.mxu0 0.0
  %318 = vmatmul.mubr.f32.gmra.mrb[0].mxu0 %v231
  %v319 = vpop.f32.mrb[0].mxu0
  %v320 = vadd.f32 0.0, %v319
  %v321 = vpop.f32.mrb[0].mxu0
  %322 = vdwg.mxu0
  %s323 = scalar_lea.vmem %s0, 32
  %v324 = vld [vmem:[%s323] sm:$0xff]
  %v325 = vld [vmem:[%s323 + $0x8] sm:$0xff]
  %v326 = vadd.f32 %v324, %v315
  %v327 = vadd.f32 %v325, %v320
  %v328 = vtanh.pop %v326
  %v329 = vtanh.pop %v327
  %330 = vst [vmem:[#allocation2] sm:$0xff] %v328
  %331 = vst [vmem:[#allocation2 + $0x8] sm:$0xff] %v329
  %s332 = scalar_lea.vmem %s3, 32
  %333 = vst [vmem:[%s332] sm:$0xff] %v328
  %334 = vst [vmem:[%s332 + $0x8] sm:$0xff] %v329
  %v335 = vld [vmem:[#allocation2] sm:$0xff]
  %v336 = vld [vmem:[#allocation2 + $0x8] sm:$0xff]
  %v337 = vld [vmem:[%s2] sm:$0xff]
  %v338 = vld [vmem:[%s2 + $0x8] sm:$0xff]
  %v339 = vld [vmem:[%s2 + $0x10] sm:$0xff]
  %v340 = vld [vmem:[%s2 + $0x18] sm:$0xff]
  %v341 = vld [vmem:[%s2 + $0x20] sm:$0xff]
  %v342 = vld [vmem:[%s2 + $0x28] sm:$0xff]
  %v343 = vld [vmem:[%s2 + $0x30] sm:$0xff]
  %v344 = vld [vmem:[%s2 + $0x38] sm:$0xff]
  %v345 = vld [vmem:[%s2 + $0x40] sm:$0xff]
  %v346 = vld [vmem:[%s2 + $0x48] sm:$0xff]
  %v347 = vld [vmem:[%s2 + $0x50] sm:$0xff]
  %v348 = vld [vmem:[%s2 + $0x58] sm:$0xff]
  %v349 = vld [vmem:[%s2 + $0x60] sm:$0xff]
  %v350 = vld [vmem:[%s2 + $0x68] sm:$0xff]
  %v351 = vld [vmem:[%s2 + $0x70] sm:$0xff]
  %v352 = vld [vmem:[%s2 + $0x78] sm:$0xff]
  %353 = vmatprep.subr.mxu0 0.0
  %354 = vmatpush1.msra.mxu0 %v337
  %355 = vmatprep.subr.mxu0 0.0
  %356 = vmatpush1.msra.mxu0 %v338
  %357 = vmatprep.subr.mxu0 0.0
  %358 = vmatpush1.msra.mxu0 %v339
  %359 = vmatprep.subr.mxu0 0.0
  %360 = vmatpush1.msra.mxu0 %v340
  %361 = vmatprep.subr.mxu0 0.0
  %362 = vmatpush1.msra.mxu0 %v341
  %363 = vmatprep.subr.mxu0 0.0
  %364 = vmatpush1.msra.mxu0 %v342
  %365 = vmatprep.subr.mxu0 0.0
  %366 = vmatpush1.msra.mxu0 %v343
  %367 = vmatprep.subr.mxu0 0.0
  %368 = vmatpush1.msra.mxu0 %v344
  %369 = vmatprep.subr.mxu0 0.0
  %370 = vmatpush1.msra.mxu0 %v345
  %371 = vmatprep.subr.mxu0 0.0
  %372 = vmatpush1.msra.mxu0 %v346
  %373 = vmatprep.subr.mxu0 0.0
  %374 = vmatpush1.msra.mxu0 %v347
  %375 = vmatprep.subr.mxu0 0.0
  %376 = vmatpush1.msra.mxu0 %v348
  %377 = vmatprep.subr.mxu0 0.0
  %378 = vmatpush1.msra.mxu0 %v349
  %379 = vmatprep.subr.mxu0 0.0
  %380 = vmatpush1.msra.mxu0 %v350
  %381 = vmatprep.subr.mxu0 0.0
  %382 = vmatpush1.msra.mxu0 %v351
  %383 = vmatprep.subr.mxu0 0.0
  %384 = vmatpush1.msra.mxu0 %v352
  %385 = vmatprep.subr.mxu0 0.0
  %386 = vmatpush1.msra.mxu0 0.0
  %387 = vmatprep.subr.mxu0 0.0
  %388 = vmatpush1.msra.mxu0 0.0
  %389 = vmatprep.subr.mxu0 0.0
  %390 = vmatpush1.msra.mxu0 0.0
  %391 = vmatprep.subr.mxu0 0.0
  %392 = vmatpush1.msra.mxu0 0.0
  %393 = vmatprep.subr.mxu0 0.0
  %394 = vmatpush1.msra.mxu0 0.0
  %395 = vmatprep.subr.mxu0 0.0
  %396 = vmatpush1.msra.mxu0 0.0
  %397 = vmatprep.subr.mxu0 0.0
  %398 = vmatpush1.msra.mxu0 0.0
  %399 = vmatprep.subr.mxu0 0.0
  %400 = vmatpush1.msra.mxu0 0.0
  %401 = vmatprep.subr.mxu0 0.0
  %402 = vmatpush1.msra.mxu0 0.0
  %403 = vmatprep.subr.mxu0 0.0
  %404 = vmatpush1.msra.mxu0 0.0
  %405 = vmatprep.subr.mxu0 0.0
  %406 = vmatpush1.msra.mxu0 0.0
  %407 = vmatprep.subr.mxu0 0.0
  %408 = vmatpush1.msra.mxu0 0.0
  %409 = vmatprep.subr.mxu0 0.0
  %410 = vmatpush1.msra.mxu0 0.0
  %411 = vmatprep.subr.mxu0 0.0
  %412 = vmatpush1.msra.mxu0 0.0
  %413 = vmatprep.subr.mxu0 0.0
  %414 = vmatpush1.msra.mxu0 0.0
  %415 = vmatprep.subr.mxu0 0.0
  %416 = vmatpush1.msra.mxu0 0.0
  %417 = vmatprep.mubr.f32.mxu0 0.0
  %418 = vmatmul.mubr.f32.gmra.mrb[0].mxu0 %v335
  %v419 = vpop.f32.mrb[0].mxu0
  %v420 = vadd.f32 0.0, %v419
  %v421 = vpop.f32.mrb[0].mxu0
  %422 = vmatprep.mubr.f32.mxu0 0.0
  %423 = vmatmul.mubr.f32.gmra.mrb[0].mxu0 %v336
  %v424 = vpop.f32.mrb[0].mxu0
  %v425 = vadd.f32 0.0, %v424
  %v426 = vpop.f32.mrb[0].mxu0
  %427 = vdwg.mxu0
  %s428 = scalar_lea.vmem %s0, 48
  %v429 = vld [vmem:[%s428] sm:$0xff]
  %v430 = vld [vmem:[%s428 + $0x8] sm:$0xff]
  %v431 = vadd.f32 %v429, %v420
  %v432 = vadd.f32 %v430, %v425
  %v433 = vtanh.pop %v431
  %v434 = vtanh.pop %v432
  %435 = vst [vmem:[#allocation2] sm:$0xff] %v433
  %436 = vst [vmem:[#allocation2 + $0x8] sm:$0xff] %v434
  %s437 = scalar_lea.vmem %s3, 48
  %438 = vst [vmem:[%s437] sm:$0xff] %v433
  %439 = vst [vmem:[%s437 + $0x8] sm:$0xff] %v434
  %v440 = vld [vmem:[#allocation2] sm:$0xff]
  %v441 = vld [vmem:[#allocation2 + $0x8] sm:$0xff]
  %v442 = vld [vmem:[%s2] sm:$0xff]
  %v443 = vld [vmem:[%s2 + $0x8] sm:$0xff]
  %v444 = vld [vmem:[%s2 + $0x10] sm:$0xff]
  %v445 = vld [vmem:[%s2 + $0x18] sm:$0xff]
  %v446 = vld [vmem:[%s2 + $0x20] sm:$0xff]
  %v447 = vld [vmem:[%s2 + $0x28] sm:$0xff]
  %v448 = vld [vmem:[%s2 + $0x30] sm:$0xff]
  %v449 = vld [vmem:[%s2 + $0x38] sm:$0xff]
  %v450 = vld [vmem:[%s2 + $0x40] sm:$0xff]
  %v451 = vld [vmem:[%s2 + $0x48] sm:$0xff]
  %v452 = vld [vmem:[%s2 + $0x50] sm:$0xff]
  %v453 = vld [vmem:[%s2 + $0x58] sm:$0xff]
  %v454 = vld [vmem:[%s2 + $0x60] sm:$0xff]
  %v455 = vld [vmem:[%s2 + $0x68] sm:$0xff]
  %v456 = vld [vmem:[%s2 + $0x70] sm:$0xff]
  %v457 = vld [vmem:[%s2 + $0x78] sm:$0xff]
  %458 = vmatprep.subr.mxu0 0.0
  %459 = vmatpush1.msra.mxu0 %v442
  %460 = vmatprep.subr.mxu0 0.0
  %461 = vmatpush1.msra.mxu0 %v443
  %462 = vmatprep.subr.mxu0 0.0
  %463 = vmatpush1.msra.mxu0 %v444
  %464 = vmatprep.subr.mxu0 0.0
  %465 = vmatpush1.msra.mxu0 %v445
  %466 = vmatprep.subr.mxu0 0.0
  %467 = vmatpush1.msra.mxu0 %v446
  %468 = vmatprep.subr.mxu0 0.0
  %469 = vmatpush1.msra.mxu0 %v447
  %470 = vmatprep.subr.mxu0 0.0
  %471 = vmatpush1.msra.mxu0 %v448
  %472 = vmatprep.subr.mxu0 0.0
  %473 = vmatpush1.msra.mxu0 %v449
  %474 = vmatprep.subr.mxu0 0.0
  %475 = vmatpush1.msra.mxu0 %v450
  %476 = vmatprep.subr.mxu0 0.0
  %477 = vmatpush1.msra.mxu0 %v451
  %478 = vmatprep.subr.mxu0 0.0
  %479 = vmatpush1.msra.mxu0 %v452
  %480 = vmatprep.subr.mxu0 0.0
  %481 = vmatpush1.msra.mxu0 %v453
  %482 = vmatprep.subr.mxu0 0.0
  %483 = vmatpush1.msra.mxu0 %v454
  %484 = vmatprep.subr.mxu0 0.0
  %485 = vmatpush1.msra.mxu0 %v455
  %486 = vmatprep.subr.mxu0 0.0
  %487 = vmatpush1.msra.mxu0 %v456
  %488 = vmatprep.subr.mxu0 0.0
  %489 = vmatpush1.msra.mxu0 %v457
  %490 = vmatprep.subr.mxu0 0.0
  %491 = vmatpush1.msra.mxu0 0.0
  %492 = vmatprep.subr.mxu0 0.0
  %493 = vmatpush1.msra.mxu0 0.0
  %494 = vmatprep.subr.mxu0 0.0
  %495 = vmatpush1.msra.mxu0 0.0
  %496 = vmatprep.subr.mxu0 0.0
  %497 = vmatpush1.msra.mxu0 0.0
  %498 = vmatprep.subr.mxu0 0.0
  %499 = vmatpush1.msra.mxu0 0.0
  %500 = vmatprep.subr.mxu0 0.0
  %501 = vmatpush1.msra.mxu0 0.0
  %502 = vmatprep.subr.mxu0 0.0
  %503 = vmatpush1.msra.mxu0 0.0
  %504 = vmatprep.subr.mxu0 0.0
  %505 = vmatpush1.msra.mxu0 0.0
  %506 = vmatprep.subr.mxu0 0.0
  %507 = vmatpush1.msra.mxu0 0.0
  %508 = vmatprep.subr.mxu0 0.0
  %509 = vmatpush1.msra.mxu0 0.0
  %510 = vmatprep.subr.mxu0 0.0
  %511 = vmatpush1.msra.mxu0 0.0
  %512 = vmatprep.subr.mxu0 0.0
  %513 = vmatpush1.msra.mxu0 0.0
  %514 = vmatprep.subr.mxu0 0.0
  %515 = vmatpush1.msra.mxu0 0.0
  %516 = vmatprep.subr.mxu0 0.0
  %517 = vmatpush1.msra.mxu0 0.0
  %518 = vmatprep.subr.mxu0 0.0
  %519 = vmatpush1.msra.mxu0 0.0
  %520 = vmatprep.subr.mxu0 0.0
  %521 = vmatpush1.msra.mxu0 0.0
  %522 = vmatprep.mubr.f32.mxu0 0.0
  %523 = vmatmul.mubr.f32.gmra.mrb[0].mxu0 %v440
  %v524 = vpop.f32.mrb[0].mxu0
  %v525 = vadd.f32 0.0, %v524
  %v526 = vpop.f32.mrb[0].mxu0
  %527 = vmatprep.mubr.f32.mxu0 0.0
  %528 = vmatmul.mubr.f32.gmra.mrb[0].mxu0 %v441
  %v529 = vpop.f32.mrb[0].mxu0
  %v530 = vadd.f32 0.0, %v529
  %v531 = vpop.f32.mrb[0].mxu0
  %532 = vdwg.mxu0
  %s533 = scalar_lea.vmem %s0, 64
  %v534 = vld [vmem:[%s533] sm:$0xff]
  %v535 = vld [vmem:[%s533 + $0x8] sm:$0xff]
  %v536 = vadd.f32 %v534, %v525
  %v537 = vadd.f32 %v535, %v530
  %v538 = vtanh.pop %v536
  %v539 = vtanh.pop %v537
  %540 = vst [vmem:[#allocation2] sm:$0xff] %v538
  %541 = vst [vmem:[#allocation2 + $0x8] sm:$0xff] %v539
  %s542 = scalar_lea.vmem %s3, 64
  %543 = vst [vmem:[%s542] sm:$0xff] %v538
  %544 = vst [vmem:[%s542 + $0x8] sm:$0xff] %v539
  %v545 = vld [vmem:[#allocation2] sm:$0xff]
  %v546 = vld [vmem:[#allocation2 + $0x8] sm:$0xff]
  %v547 = vld [vmem:[%s2] sm:$0xff]
  %v548 = vld [vmem:[%s2 + $0x8] sm:$0xff]
  %v549 = vld [vmem:[%s2 + $0x10] sm:$0xff]
  %v550 = vld [vmem:[%s2 + $0x18] sm:$0xff]
  %v551 = vld [vmem:[%s2 + $0x20] sm:$0xff]
  %v552 = vld [vmem:[%s2 + $0x28] sm:$0xff]
  %v553 = vld [vmem:[%s2 + $0x30] sm:$0xff]
  %v554 = vld [vmem:[%s2 + $0x38] sm:$0xff]
  %v555 = vld [vmem:[%s2 + $0x40] sm:$0xff]
  %v556 = vld [vmem:[%s2 + $0x48] sm:$0xff]
  %v557 = vld [vmem:[%s2 + $0x50] sm:$0xff]
  %v558 = vld [vmem:[%s2 + $0x58] sm:$0xff]
  %v559 = vld [vmem:[%s2 + $0x60] sm:$0xff]
  %v560 = vld [vmem:[%s2 + $0x68] sm:$0xff]
  %v561 = vld [vmem:[%s2 + $0x70] sm:$0xff]
  %v562 = vld [vmem:[%s2 + $0x78] sm:$0xff]
  %563 = vmatprep.subr.mxu0 0.0
  %564 = vmatpush1.msra.mxu0 %v547
  %565 = vmatprep.subr.mxu0 0.0
  %566 = vmatpush1.msra.mxu0 %v548
  %567 = vmatprep.subr.mxu0 0.0
  %568 = vmatpush1.msra.mxu0 %v549
  %569 = vmatprep.subr.mxu0 0.0
  %570 = vmatpush1.msra.mxu0 %v550
  %571 = vmatprep.subr.mxu0 0.0
  %572 = vmatpush1.msra.mxu0 %v551
  %573 = vmatprep.subr.mxu0 0.0
  %574 = vmatpush1.msra.mxu0 %v552
  %575 = vmatprep.subr.mxu0 0.0
  %576 = vmatpush1.msra.mxu0 %v553
  %577 = vmatprep.subr.mxu0 0.0
  %578 = vmatpush1.msra.mxu0 %v554
  %579 = vmatprep.subr.mxu0 0.0
  %580 = vmatpush1.msra.mxu0 %v555
  %581 = vmatprep.subr.mxu0 0.0
  %582 = vmatpush1.msra.mxu0 %v556
  %583 = vmatprep.subr.mxu0 0.0
  %584 = vmatpush1.msra.mxu0 %v557
  %585 = vmatprep.subr.mxu0 0.0
  %586 = vmatpush1.msra.mxu0 %v558
  %587 = vmatprep.subr.mxu0 0.0
  %588 = vmatpush1.msra.mxu0 %v559
  %589 = vmatprep.subr.mxu0 0.0
  %590 = vmatpush1.msra.mxu0 %v560
  %591 = vmatprep.subr.mxu0 0.0
  %592 = vmatpush1.msra.mxu0 %v561
  %593 = vmatprep.subr.mxu0 0.0
  %594 = vmatpush1.msra.mxu0 %v562
  %595 = vmatprep.subr.mxu0 0.0
  %596 = vmatpush1.msra.mxu0 0.0
  %597 = vmatprep.subr.mxu0 0.0
  %598 = vmatpush1.msra.mxu0 0.0
  %599 = vmatprep.subr.mxu0 0.0
  %600 = vmatpush1.msra.mxu0 0.0
  %601 = vmatprep.subr.mxu0 0.0
  %602 = vmatpush1.msra.mxu0 0.0
  %603 = vmatprep.subr.mxu0 0.0
  %604 = vmatpush1.msra.mxu0 0.0
  %605 = vmatprep.subr.mxu0 0.0
  %606 = vmatpush1.msra.mxu0 0.0
  %607 = vmatprep.subr.mxu0 0.0
  %608 = vmatpush1.msra.mxu0 0.0
  %609 = vmatprep.subr.mxu0 0.0
  %610 = vmatpush1.msra.mxu0 0.0
  %611 = vmatprep.subr.mxu0 0.0
  %612 = vmatpush1.msra.mxu0 0.0
  %613 = vmatprep.subr.mxu0 0.0
  %614 = vmatpush1.msra.mxu0 0.0
  %615 = vmatprep.subr.mxu0 0.0
  %616 = vmatpush1.msra.mxu0 0.0
  %617 = vmatprep.subr.mxu0 0.0
  %618 = vmatpush1.msra.mxu0 0.0
  %619 = vmatprep.subr.mxu0 0.0
  %620 = vmatpush1.msra.mxu0 0.0
  %621 = vmatprep.subr.mxu0 0.0
  %622 = vmatpush1.msra.mxu0 0.0
  %623 = vmatprep.subr.mxu0 0.0
  %624 = vmatpush1.msra.mxu0 0.0
  %625 = vmatprep.subr.mxu0 0.0
  %626 = vmatpush1.msra.mxu0 0.0
  %627 = vmatprep.mubr.f32.mxu0 0.0
  %628 = vmatmul.mubr.f32.gmra.mrb[0].mxu0 %v545
  %v629 = vpop.f32.mrb[0].mxu0
  %v630 = vadd.f32 0.0, %v629
  %v631 = vpop.f32.mrb[0].mxu0
  %632 = vmatprep.mubr.f32.mxu0 0.0
  %633 = vmatmul.mubr.f32.gmra.mrb[0].mxu0 %v546
  %v634 = vpop.f32.mrb[0].mxu0
  %v635 = vadd.f32 0.0, %v634
  %v636 = vpop.f32.mrb[0].mxu0
  %637 = vdwg.mxu0
  %s638 = scalar_lea.vmem %s0, 80
  %v639 = vld [vmem:[%s638] sm:$0xff]
  %v640 = vld [vmem:[%s638 + $0x8] sm:$0xff]
  %v641 = vadd.f32 %v639, %v630
  %v642 = vadd.f32 %v640, %v635
  %v643 = vtanh.pop %v641
  %v644 = vtanh.pop %v642
  %645 = vst [vmem:[#allocation2] sm:$0xff] %v643
  %646 = vst [vmem:[#allocation2 + $0x8] sm:$0xff] %v644
  %s647 = scalar_lea.vmem %s3, 80
  %648 = vst [vmem:[%s647] sm:$0xff] %v643
  %649 = vst [vmem:[%s647 + $0x8] sm:$0xff] %v644
  %v650 = vld [vmem:[#allocation2] sm:$0xff]
  %v651 = vld [vmem:[#allocation2 + $0x8] sm:$0xff]
  %v652 = vld [vmem:[%s2] sm:$0xff]
  %v653 = vld [vmem:[%s2 + $0x8] sm:$0xff]
  %v654 = vld [vmem:[%s2 + $0x10] sm:$0xff]
  %v655 = vld [vmem:[%s2 + $0x18] sm:$0xff]
  %v656 = vld [vmem:[%s2 + $0x20] sm:$0xff]
  %v657 = vld [vmem:[%s2 + $0x28] sm:$0xff]
  %v658 = vld [vmem:[%s2 + $0x30] sm:$0xff]
  %v659 = vld [vmem:[%s2 + $0x38] sm:$0xff]
  %v660 = vld [vmem:[%s2 + $0x40] sm:$0xff]
  %v661 = vld [vmem:[%s2 + $0x48] sm:$0xff]
  %v662 = vld [vmem:[%s2 + $0x50] sm:$0xff]
  %v663 = vld [vmem:[%s2 + $0x58] sm:$0xff]
  %v664 = vld [vmem:[%s2 + $0x60] sm:$0xff]
  %v665 = vld [vmem:[%s2 + $0x68] sm:$0xff]
  %v666 = vld [vmem:[%s2 + $0x70] sm:$0xff]
  %v667 = vld [vmem:[%s2 + $0x78] sm:$0xff]
  %668 = vmatprep.subr.mxu0 0.0
  %669 = vmatpush1.msra.mxu0 %v652
  %670 = vmatprep.subr.mxu0 0.0
  %671 = vmatpush1.msra.mxu0 %v653
  %672 = vmatprep.subr.mxu0 0.0
  %673 = vmatpush1.msra.mxu0 %v654
  %674 = vmatprep.subr.mxu0 0.0
  %675 = vmatpush1.msra.mxu0 %v655
  %676 = vmatprep.subr.mxu0 0.0
  %677 = vmatpush1.msra.mxu0 %v656
  %678 = vmatprep.subr.mxu0 0.0
  %679 = vmatpush1.msra.mxu0 %v657
  %680 = vmatprep.subr.mxu0 0.0
  %681 = vmatpush1.msra.mxu0 %v658
  %682 = vmatprep.subr.mxu0 0.0
  %683 = vmatpush1.msra.mxu0 %v659
  %684 = vmatprep.subr.mxu0 0.0
  %685 = vmatpush1.msra.mxu0 %v660
  %686 = vmatprep.subr.mxu0 0.0
  %687 = vmatpush1.msra.mxu0 %v661
  %688 = vmatprep.subr.mxu0 0.0
  %689 = vmatpush1.msra.mxu0 %v662
  %690 = vmatprep.subr.mxu0 0.0
  %691 = vmatpush1.msra.mxu0 %v663
  %692 = vmatprep.subr.mxu0 0.0
  %693 = vmatpush1.msra.mxu0 %v664
  %694 = vmatprep.subr.mxu0 0.0
  %695 = vmatpush1.msra.mxu0 %v665
  %696 = vmatprep.subr.mxu0 0.0
  %697 = vmatpush1.msra.mxu0 %v666
  %698 = vmatprep.subr.mxu0 0.0
  %699 = vmatpush1.msra.mxu0 %v667
  %700 = vmatprep.subr.mxu0 0.0
  %701 = vmatpush1.msra.mxu0 0.0
  %702 = vmatprep.subr.mxu0 0.0
  %703 = vmatpush1.msra.mxu0 0.0
  %704 = vmatprep.subr.mxu0 0.0
  %705 = vmatpush1.msra.mxu0 0.0
  %706 = vmatprep.subr.mxu0 0.0
  %707 = vmatpush1.msra.mxu0 0.0
  %708 = vmatprep.subr.mxu0 0.0
  %709 = vmatpush1.msra.mxu0 0.0
  %710 = vmatprep.subr.mxu0 0.0
  %711 = vmatpush1.msra.mxu0 0.0
  %712 = vmatprep.subr.mxu0 0.0
  %713 = vmatpush1.msra.mxu0 0.0
  %714 = vmatprep.subr.mxu0 0.0
  %715 = vmatpush1.msra.mxu0 0.0
  %716 = vmatprep.subr.mxu0 0.0
  %717 = vmatpush1.msra.mxu0 0.0
  %718 = vmatprep.subr.mxu0 0.0
  %719 = vmatpush1.msra.mxu0 0.0
  %720 = vmatprep.subr.mxu0 0.0
  %721 = vmatpush1.msra.mxu0 0.0
  %722 = vmatprep.subr.mxu0 0.0
  %723 = vmatpush1.msra.mxu0 0.0
  %724 = vmatprep.subr.mxu0 0.0
  %725 = vmatpush1.msra.mxu0 0.0
  %726 = vmatprep.subr.mxu0 0.0
  %727 = vmatpush1.msra.mxu0 0.0
  %728 = vmatprep.subr.mxu0 0.0
  %729 = vmatpush1.msra.mxu0 0.0
  %730 = vmatprep.subr.mxu0 0.0
  %731 = vmatpush1.msra.mxu0 0.0
  %732 = vmatprep.mubr.f32.mxu0 0.0
  %733 = vmatmul.mubr.f32.gmra.mrb[0].mxu0 %v650
  %v734 = vpop.f32.mrb[0].mxu0
  %v735 = vadd.f32 0.0, %v734
  %v736 = vpop.f32.mrb[0].mxu0
  %737 = vmatprep.mubr.f32.mxu0 0.0
  %738 = vmatmul.mubr.f32.gmra.mrb[0].mxu0 %v651
  %v739 = vpop.f32.mrb[0].mxu0
  %v740 = vadd.f32 0.0, %v739
  %v741 = vpop.f32.mrb[0].mxu0
  %742 = vdwg.mxu0
  %s743 = scalar_lea.vmem %s0, 96
  %v744 = vld [vmem:[%s743] sm:$0xff]
  %v745 = vld [vmem:[%s743 + $0x8] sm:$0xff]
  %v746 = vadd.f32 %v744, %v735
  %v747 = vadd.f32 %v745, %v740
  %v748 = vtanh.pop %v746
  %v749 = vtanh.pop %v747
  %750 = vst [vmem:[#allocation2] sm:$0xff] %v748
  %751 = vst [vmem:[#allocation2 + $0x8] sm:$0xff] %v749
  %s752 = scalar_lea.vmem %s3, 96
  %753 = vst [vmem:[%s752] sm:$0xff] %v748
  %754 = vst [vmem:[%s752 + $0x8] sm:$0xff] %v749
  %v755 = vld [vmem:[#allocation2] sm:$0xff]
  %v756 = vld [vmem:[#allocation2 + $0x8] sm:$0xff]
  %v757 = vld [vmem:[%s2] sm:$0xff]
  %v758 = vld [vmem:[%s2 + $0x8] sm:$0xff]
  %v759 = vld [vmem:[%s2 + $0x10] sm:$0xff]
  %v760 = vld [vmem:[%s2 + $0x18] sm:$0xff]
  %v761 = vld [vmem:[%s2 + $0x20] sm:$0xff]
  %v762 = vld [vmem:[%s2 + $0x28] sm:$0xff]
  %v763 = vld [vmem:[%s2 + $0x30] sm:$0xff]
  %v764 = vld [vmem:[%s2 + $0x38] sm:$0xff]
  %v765 = vld [vmem:[%s2 + $0x40] sm:$0xff]
  %v766 = vld [vmem:[%s2 + $0x48] sm:$0xff]
  %v767 = vld [vmem:[%s2 + $0x50] sm:$0xff]
  %v768 = vld [vmem:[%s2 + $0x58] sm:$0xff]
  %v769 = vld [vmem:[%s2 + $0x60] sm:$0xff]
  %v770 = vld [vmem:[%s2 + $0x68] sm:$0xff]
  %v771 = vld [vmem:[%s2 + $0x70] sm:$0xff]
  %v772 = vld [vmem:[%s2 + $0x78] sm:$0xff]
  %773 = vmatprep.subr.mxu0 0.0
  %774 = vmatpush1.msra.mxu0 %v757
  %775 = vmatprep.subr.mxu0 0.0
  %776 = vmatpush1.msra.mxu0 %v758
  %777 = vmatprep.subr.mxu0 0.0
  %778 = vmatpush1.msra.mxu0 %v759
  %779 = vmatprep.subr.mxu0 0.0
  %780 = vmatpush1.msra.mxu0 %v760
  %781 = vmatprep.subr.mxu0 0.0
  %782 = vmatpush1.msra.mxu0 %v761
  %783 = vmatprep.subr.mxu0 0.0
  %784 = vmatpush1.msra.mxu0 %v762
  %785 = vmatprep.subr.mxu0 0.0
  %786 = vmatpush1.msra.mxu0 %v763
  %787 = vmatprep.subr.mxu0 0.0
  %788 = vmatpush1.msra.mxu0 %v764
  %789 = vmatprep.subr.mxu0 0.0
  %790 = vmatpush1.msra.mxu0 %v765
  %791 = vmatprep.subr.mxu0 0.0
  %792 = vmatpush1.msra.mxu0 %v766
  %793 = vmatprep.subr.mxu0 0.0
  %794 = vmatpush1.msra.mxu0 %v767
  %795 = vmatprep.subr.mxu0 0.0
  %796 = vmatpush1.msra.mxu0 %v768
  %797 = vmatprep.subr.mxu0 0.0
  %798 = vmatpush1.msra.mxu0 %v769
  %799 = vmatprep.subr.mxu0 0.0
  %800 = vmatpush1.msra.mxu0 %v770
  %801 = vmatprep.subr.mxu0 0.0
  %802 = vmatpush1.msra.mxu0 %v771
  %803 = vmatprep.subr.mxu0 0.0
  %804 = vmatpush1.msra.mxu0 %v772
  %805 = vmatprep.subr.mxu0 0.0
  %806 = vmatpush1.msra.mxu0 0.0
  %807 = vmatprep.subr.mxu0 0.0
  %808 = vmatpush1.msra.mxu0 0.0
  %809 = vmatprep.subr.mxu0 0.0
  %810 = vmatpush1.msra.mxu0 0.0
  %811 = vmatprep.subr.mxu0 0.0
  %812 = vmatpush1.msra.mxu0 0.0
  %813 = vmatprep.subr.mxu0 0.0
  %814 = vmatpush1.msra.mxu0 0.0
  %815 = vmatprep.subr.mxu0 0.0
  %816 = vmatpush1.msra.mxu0 0.0
  %817 = vmatprep.subr.mxu0 0.0
  %818 = vmatpush1.msra.mxu0 0.0
  %819 = vmatprep.subr.mxu0 0.0
  %820 = vmatpush1.msra.mxu0 0.0
  %821 = vmatprep.subr.mxu0 0.0
  %822 = vmatpush1.msra.mxu0 0.0
  %823 = vmatprep.subr.mxu0 0.0
  %824 = vmatpush1.msra.mxu0 0.0
  %825 = vmatprep.subr.mxu0 0.0
  %826 = vmatpush1.msra.mxu0 0.0
  %827 = vmatprep.subr.mxu0 0.0
  %828 = vmatpush1.msra.mxu0 0.0
  %829 = vmatprep.subr.mxu0 0.0
  %830 = vmatpush1.msra.mxu0 0.0
  %831 = vmatprep.subr.mxu0 0.0
  %832 = vmatpush1.msra.mxu0 0.0
  %833 = vmatprep.subr.mxu0 0.0
  %834 = vmatpush1.msra.mxu0 0.0
  %835 = vmatprep.subr.mxu0 0.0
  %836 = vmatpush1.msra.mxu0 0.0
  %837 = vmatprep.mubr.f32.mxu0 0.0
  %838 = vmatmul.mubr.f32.gmra.mrb[0].mxu0 %v755
  %v839 = vpop.f32.mrb[0].mxu0
  %v840 = vadd.f32 0.0, %v839
  %v841 = vpop.f32.mrb[0].mxu0
  %842 = vmatprep.mubr.f32.mxu0 0.0
  %843 = vmatmul.mubr.f32.gmra.mrb[0].mxu0 %v756
  %v844 = vpop.f32.mrb[0].mxu0
  %v845 = vadd.f32 0.0, %v844
  %v846 = vpop.f32.mrb[0].mxu0
  %847 = vdwg.mxu0
  %s848 = scalar_lea.vmem %s0, 112
  %v849 = vld [vmem:[%s848] sm:$0xff]
  %v850 = vld [vmem:[%s848 + $0x8] sm:$0xff]
  %v851 = vadd.f32 %v849, %v840
  %v852 = vadd.f32 %v850, %v845
  %v853 = vtanh.pop %v851
  %v854 = vtanh.pop %v852
  %855 = vst [vmem:[#allocation2] sm:$0xff] %v853
  %856 = vst [vmem:[#allocation2 + $0x8] sm:$0xff] %v854
  %s857 = scalar_lea.vmem %s3, 112
  %858 = vst [vmem:[%s857] sm:$0xff] %v853
  %859 = vst [vmem:[%s857 + $0x8] sm:$0xff] %v854
  // Predicated region
  $region18: #{elman_sequence_padded.3} parent=0 // pred_check
    _
  $region19: #{elman_sequence_padded.3} parent=0 // pred_check_branch
    %861 = sbr.rel (0) target = $region21
  $region20: #{elman_sequence_padded.3} parent=0 // pred_region
    _
  $region21: #{elman_sequence_padded.3} parent=0 // pred_fallthru
    _
  // Predicated region
  $region22: #{elman_sequence_padded.3} parent=0 // pred_check
    _
  $region23: #{elman_sequence_padded.3} parent=0 // pred_check_branch
    %863 = sbr.rel (0) target = $region25
  $region24: #{elman_sequence_padded.3} parent=0 // pred_region
    _
  $region25: #{elman_sequence_padded.3} parent=0 // pred_fallthru
    _

</llo_original>
